<compile_context>
chip_gen: v6e
topology: v6e:2x2x1
jax: 0.10.0
libtpu: 0.0.40
codegen_flags: <defaults>
</compile_context>

<pallas_src>
import jax
import jax.numpy as jnp
import numpy as np
from jax.experimental import pallas as pl
from jax.experimental.pallas import tpu as pltpu

SELU_SCALE = 1.0507009873554805
SELU_ALPHA = 1.6732632423543772
LN_EPS = 1e-5
LANE = 128


def _selu(x):
    # exp only of the (clamped) negative branch: cheap insurance against inf in dead lanes
    neg = SELU_ALPHA * (jnp.exp(jnp.minimum(x, 0.0)) - 1.0)
    return SELU_SCALE * jnp.where(x > 0, x, neg)


def _round_up(x, m):
    return ((x + m - 1) // m) * m


def _vmem_capacity_bytes():
    try:
        return int(pltpu.get_tpu_info().vmem_capacity_bytes)
    except Exception:
        return 64 * 1024 * 1024  # v7x-safe fallback


_VMEM_CAP = _vmem_capacity_bytes()


def _choose_rows(total, per_row_bytes, budget_bytes, align, max_rows, min_steps):
    """Largest row tile (multiple of `align`) that fits the VMEM byte budget, capped so
    the grid keeps >= min_steps steps when there is enough work (megacore on v7x)."""
    t = min(_round_up(max(total, 1), align), _round_up(max_rows, align))
    while t > align and t * per_row_bytes > budget_bytes:
        t -= align
    if min_steps > 1 and total > align:
        t = min(t, _round_up(-(-total // min_steps), align))
    return max(align, t)


# ---------------- Pallas kernels ----------------

def _make_stage1_kernel(c_real, c_pad):
    """Grouped conv1 (as dense GEMM on im2col rows) + CLayerNorm + SELU, bf16 out."""
    inv_c = 1.0 / float(c_real)
    needs_mask = c_pad != c_real

    def kernel(p_ref, w_ref, b_ref, g_ref, beta_ref, o_ref):
        # p_ref: (TILE_M, K) bf16 im2col rows (batch*spatial fused into M)
        # w_ref: (K, Cp)    bf16 block-diagonal grouped-conv weight, Cp = pad128(c_mid)
        h = jnp.dot(p_ref[...], w_ref[...], preferred_element_type=jnp.float32)
        h = h + b_ref[...]                                    # (TILE_M, Cp) f32
        # CLayerNorm over the real c_mid channels (padded lanes of h are exactly zero).
        mean = jnp.sum(h, axis=-1, keepdims=True) * inv_c
        d = h - mean
        if needs_mask:
            lane = jax.lax.broadcasted_iota(jnp.int32, h.shape, 1)
            d2 = jnp.where(lane < c_real, d * d, 0.0)
        else:
            d2 = d * d
        var = jnp.sum(d2, axis=-1, keepdims=True) * inv_c     # two-pass variance
        hn = d * jax.lax.rsqrt(var + LN_EPS)
        hn = hn * g_ref[...] + beta_ref[...]                  # padded lanes -> exactly 0
        o_ref[...] = _selu(hn).astype(o_ref.dtype)            # bf16 stage boundary

    return kernel


def _make_stage2_kernel(tr, wo2p, ho2, wo2, ho2p, c1p, c2p):
    """Grouped conv2 as 9 shifted-tap GEMMs over parity planes + SELU + tile max-pool."""
    # (plane, row-shift dr, tap index k = kh*3 + kw)
    #   planes: 0 ee(dc=0)  1 ee(dc=1)  2 eo   3 oe(dc=0)  4 oe(dc=1)  5 oo
    plan = [
        (0, 0, 0), (0, 1, 6),
        (1, 0, 2), (1, 1, 8),
        (2, 0, 1), (2, 1, 7),
        (3, 0, 3),
        (4, 0, 5),
        (5, 0, 4),
    ]
    rows = tr * wo2p
    mask_w = wo2p != wo2
    mask_h = ho2p != ho2

    def kernel(p_ref, halo_ref, w_ref, b_ref, y_ref, pool_ref):
        # p_ref:    (6, TR, Wo2p, C1p) bf16  (6 parity planes, one row tile)
        # halo_ref: (3, 1, Wo2p, C1p)  bf16  (next row of planes 0..2 -> dr=1 halo)
        # w_ref:    (9, C1p, C2p)      bf16  (per-tap dense block-diag weights)
        i = pl.program_id(1)
        acc = jnp.zeros((rows, c2p), jnp.float32)
        for p in range(6):
            full = p_ref[p]                                   # (TR, Wo2p, C1p)
            taps = [(dr, k) for (pp, dr, k) in plan if pp == p]
            if any(dr == 1 for dr, _ in taps):
                ext = jnp.concatenate([full, halo_ref[p]], axis=0)  # (TR+1, Wo2p, C1p)
            for dr, k in taps:
                lhs3 = full if dr == 0 else ext[1:tr + 1]
                acc = acc + jnp.dot(lhs3.reshape(rows, c1p), w_ref[k],
                                    preferred_element_type=jnp.float32)
        h = _selu(acc + b_ref[...])                           # (rows, C2p) f32
        h = h.reshape(tr, wo2p, c2p)

        # Mask only when spatial padding exists (statically elided otherwise); the masked
        # (-inf) region is cropped outside and is excluded from the pooled max here.
        valid = None
        if mask_w:
            valid = jax.lax.broadcasted_iota(jnp.int32, (tr, wo2p, c2p), 1) < wo2
        if mask_h:
            rv = (jax.lax.broadcasted_iota(jnp.int32, (tr, wo2p, c2p), 0) + i * tr) < ho2
            valid = rv if valid is None else (valid & rv)
        if valid is not None:
            h = jnp.where(valid, h, -jnp.inf)
        y_ref[0] = h
        # per-(batch, row-tile) partial max -> combined with a tiny jnp.max outside,
        # keeping both grid axes "parallel" (megacore-friendly even at B == 1).
        pool_ref[0, 0] = jnp.max(jnp.max(h, axis=1), axis=0, keepdims=True)

    return kernel


# ---------------- pallas_call wrappers ----------------

def _stage1(p_bf, w_bf, b, g, beta, c_real, tile_m, vmem_limit):
    Mp, Kp = p_bf.shape
    Cp = w_bf.shape[1]
    return pl.pallas_call(
        _make_stage1_kernel(c_real, Cp),
        out_shape=jax.ShapeDtypeStruct((Mp, Cp), jnp.bfloat16),
        grid=(Mp // tile_m,),
        in_specs=[
            pl.BlockSpec((tile_m, Kp), lambda i: (i, 0)),
            pl.BlockSpec((Kp, Cp), lambda i: (0, 0)),
            pl.BlockSpec((1, Cp), lambda i: (0, 0)),
            pl.BlockSpec((1, Cp), lambda i: (0, 0)),
            pl.BlockSpec((1, Cp), lambda i: (0, 0)),
        ],
        out_specs=pl.BlockSpec((tile_m, Cp), lambda i: (i, 0)),
        compiler_params=pltpu.CompilerParams(
            dimension_semantics=("parallel",),
            vmem_limit_bytes=vmem_limit),
    )(p_bf, w_bf, b, g, beta)


def _stage2(planes, w2, b2, *, B, tr, n_tiles, wo2p, ho2, wo2, c1p, c2p, vmem_limit):
    ho2p = tr * n_tiles
    y, pool = pl.pallas_call(
        _make_stage2_kernel(tr, wo2p, ho2, wo2, ho2p, c1p, c2p),
        out_shape=(jax.ShapeDtypeStruct((B, ho2p, wo2p, c2p), jnp.float32),
                   jax.ShapeDtypeStruct((B, n_tiles, 1, c2p), jnp.float32)),
        grid=(B, n_tiles),
        in_specs=[
            # main blocks: the 6 parity planes of batch b, output rows [i*TR, (i+1)*TR)
            pl.BlockSpec((6, tr, wo2p, c1p), lambda b, i: (b, i, 0, 0)),
            # 1-row halo (planes 0..2 only) at output row TR*(i+1) -> same array, 2nd spec
            pl.BlockSpec((3, 1, wo2p, c1p), lambda b, i: (2 * b, tr * (i + 1), 0, 0)),
            pl.BlockSpec((9, c1p, c2p), lambda b, i: (0, 0, 0)),
            pl.BlockSpec((1, c2p), lambda b, i: (0, 0)),
        ],
        out_specs=(pl.BlockSpec((1, tr, wo2p, c2p), lambda b, i: (b, i, 0, 0)),
                   pl.BlockSpec((1, 1, 1, c2p), lambda b, i: (b, i, 0, 0))),
        compiler_params=pltpu.CompilerParams(
            dimension_semantics=("parallel", "parallel"),
            vmem_limit_bytes=vmem_limit),
    )(planes, planes, w2, b2)
    return y, pool


# ---------------- JAX glue (layout plumbing outside the kernels) ----------------

def _im2col(x_nhwc, ksize=3, stride=2, pad=1):
    # replicate padding == padding_mode='replicate'
    xp = jnp.pad(x_nhwc, ((0, 0), (pad, pad), (pad, pad), (0, 0)), mode='edge')
    B, Hp, Wp, C = xp.shape
    Ho = (Hp - ksize) // stride + 1
    Wo = (Wp - ksize) // stride + 1
    taps = []
    for kh in range(ksize):
        for kw in range(ksize):
            taps.append(xp[:, kh:kh + stride * Ho:stride, kw:kw + stride * Wo:stride, :])
    p = jnp.stack(taps, axis=3)                               # (B, Ho, Wo, K*K, C)
    return p.reshape(B, Ho * Wo, ksize * ksize * C), Ho, Wo


def _grouped_weight_dense(w, groups, cin_pad, cout_pad):
    # (Cout, Cin_g, KH, KW) -> (KH, KW, cin_pad, cout_pad): block-diagonal over groups,
    # zero-padded rows/cols keep the lane axes dense.
    Cout, Cin_g, KH, KW = w.shape
    Cout_g = Cout // groups
    wd = jnp.zeros((KH, KW, cin_pad, cout_pad), jnp.float32)
    for g in range(groups):
        blk = jnp.transpose(w[g * Cout_g:(g + 1) * Cout_g], (2, 3, 1, 0)).astype(jnp.float32)
        wd = wd.at[:, :, g * Cin_g:(g + 1) * Cin_g, g * Cout_g:(g + 1) * Cout_g].set(blk)
    return wd


def _pad_row(v, n):
    v = v.astype(jnp.float32)
    return jnp.pad(v, (0, n - v.shape[0])).reshape(1, n)


def aorta_forward(x_nchw, params, groups):
    """Equivalent of Aorta.forward: returns (conv stack output NCHW, AdaptiveMaxPool2d(1))."""
    B, c_in, H, W = x_nchw.shape
    c_mid = params['w1'].shape[0]
    c_out = params['w2'].shape[0]
    C1p = _round_up(c_mid, LANE)
    C2p = _round_up(c_out, LANE)

    vmem_limit = int(min(_VMEM_CAP * 3 // 4, 100 * 1024 * 1024))
    budget = int(_VMEM_CAP * 2 // 5)   # per-step block budget (double-buffered)

    # cast to bf16 up-front: the im2col patch tensor is materialized at half the bytes
    x = jnp.transpose(x_nchw, (0, 2, 3, 1)).astype(jnp.bfloat16)   # NCHW -> NHWC

    # ---- stage 1: grouped conv (k3 s2 replicate pad) + CLayerNorm + SELU (fused) ----
    p1, Ho1, Wo1 = _im2col(x)
    M, K1 = B * p1.shape[1], p1.shape[2]
    K1p = _round_up(K1, LANE)
    if K1p > int(1.15 * K1) + 1:        # lane-align K only when the zero-pad waste is small
        K1p = K1
    w1d = _grouped_weight_dense(params['w1'], groups, c_in, C1p).reshape(9 * c_in, C1p)
    if K1p != K1:
        w1d = jnp.pad(w1d, ((0, K1p - K1), (0, 0)))
    w1d = w1d.astype(jnp.bfloat16)
    b1 = _pad_row(params['b1'], C1p)
    g1 = _pad_row(params['ln_gamma'], C1p)
    be1 = _pad_row(params['ln_beta'], C1p)

    per_row1 = 4 * K1p + 4 * C1p + 12 * C1p    # dbl-buffered bf16 in/out + f32 temps
    tile_m = _choose_rows(M, per_row1, budget, align=16, max_rows=2048, min_steps=2)
    Mp = _round_up(M, tile_m)
    p1 = p1.reshape(M, K1)
    if K1p != K1:
        p1 = jnp.pad(p1, ((0, 0), (0, K1p - K1)))
    if Mp != M:
        p1 = jnp.pad(p1, ((0, Mp - M), (0, 0)))
    h1 = _stage1(p1, w1d, b1, g1, be1, c_mid, tile_m, vmem_limit)
    h1 = h1[:M].reshape(B, Ho1, Wo1, C1p)          # bf16; lanes >= c_mid are exact zeros

    # ---- stage 2: grouped conv + SELU + AdaptiveMaxPool2d(1), no im2col round trip ----
    # stride-2 3x3 conv == 9 shifted 1x1 convs on the parity planes of the padded input:
    #   ee[r,c]=hp[2r,2c]  eo[r,c]=hp[2r,2c+1]  oe[r,c]=hp[2r+1,2c]  oo[r,c]=hp[2r+1,2c+1]
    Ho2 = -(-Ho1 // 2)
    Wo2 = -(-Wo1 // 2)
    Wo2p = _round_up(Wo2, 8)

    per_row2 = Wo2p * (28 * C1p + 24 * C2p)
    max_tr = max(1, 2048 // Wo2p)
    min_steps2 = 2 if B == 1 else 1                 # give v7x's 2 TCs work even at B == 1
    TR = _choose_rows(Ho2, per_row2, budget, align=1, max_rows=max_tr, min_steps=min_steps2)
    n_tiles = -(-Ho2 // TR)
    Ho2p = n_tiles * TR
    Hr = Ho2p + 1                                   # +1 so the dr=1 halo row always exists

    hp = jnp.pad(h1, ((0, 0), (1, 1), (1, 1), (0, 0)), mode='edge')
    E, O = hp[:, 0::2], hp[:, 1::2]
    ee, eo = E[:, :, 0::2], E[:, :, 1::2]
    oe, oo = O[:, :, 0::2], O[:, :, 1::2]

    def _plane(src, dc):
        p = src[:, :, dc:dc + Wo2, :]
        return jnp.pad(p, ((0, 0), (0, Hr - p.shape[1]), (0, Wo2p - Wo2), (0, 0)))

    planes = jnp.stack(
        [_plane(ee, 0), _plane(ee, 1), _plane(eo, 0),
         _plane(oe, 0), _plane(oe, 1), _plane(oo, 0)], axis=1)     # (B, 6, Hr, Wo2p, C1p)
    planes = planes.reshape(B * 6, Hr, Wo2p, C1p)

    w2d = _grouped_weight_dense(params['w2'], groups, C1p, C2p)
    w2d = w2d.reshape(9, C1p, C2p).astype(jnp.bfloat16)
    b2 = _pad_row(params['b2'], C2p)

    y_full, pool_part = _stage2(planes, w2d, b2, B=B, tr=TR, n_tiles=n_tiles, wo2p=Wo2p,
                                ho2=Ho2, wo2=Wo2, c1p=C1p, c2p=C2p, vmem_limit=vmem_limit)

    y = y_full[:, :Ho2, :Wo2, :c_out]
    y_nchw = jnp.transpose(y, (0, 3, 1, 2))
    pooled = jnp.max(pool_part[:, :, 0, :], axis=1)[:, :c_out].reshape(B, c_out, 1, 1)
    return y_nchw, pooled


# ---------------- pure-JAX reference (for verification only) ----------------

def reference_forward(x_nchw, params, groups):
    def conv(xh, w, b):
        xp = jnp.pad(xh, ((0, 0), (1, 1), (1, 1), (0, 0)), mode='edge')
        wt = jnp.transpose(w, (2, 3, 1, 0))                   # OIHW -> HWIO
        y = jax.lax.conv_general_dilated(
            xp, wt, window_strides=(2, 2), padding='VALID',
            dimension_numbers=('NHWC', 'HWIO', 'NHWC'),
            feature_group_count=groups,
            precision=jax.lax.Precision.HIGHEST)
        return y + b

    xh = jnp.transpose(x_nchw, (0, 2, 3, 1)).astype(jnp.float32)
    h = conv(xh, params['w1'], params['b1'])
    mean = h.mean(-1, keepdims=True)
    var = ((h - mean) ** 2).mean(-1, keepdims=True)
    h = (h - mean) / jnp.sqrt(var + LN_EPS) * params['ln_gamma'] + params['ln_beta']
    h = _selu(h)
    h = _selu(conv(h, params['w2'], params['b2']))
    y_nchw = jnp.transpose(h, (0, 3, 1, 2))
    pooled = jnp.max(h, axis=(1, 2)).reshape(h.shape[0], h.shape[3], 1, 1)
    return y_nchw, pooled


if __name__ == "__main__":
    B, c_in, H, W = 2, 4, 16, 16
    c_mid, c_out = 8, 8
    groups = 4 if c_in % 4 == 0 else 1

    key = jax.random.PRNGKey(0)
    k1, k2, k3, k4, kx = jax.random.split(key, 5)
    params = {
        'w1': 0.3 * jax.random.normal(k1, (c_mid, c_in // groups, 3, 3), jnp.float32),
        'b1': 0.1 * jax.random.normal(k2, (c_mid,), jnp.float32),
        'ln_gamma': jnp.ones((c_mid,), jnp.float32),   # nn.LayerNorm default init
        'ln_beta': jnp.zeros((c_mid,), jnp.float32),
        'w2': 0.3 * jax.random.normal(k3, (c_out, c_mid // groups, 3, 3), jnp.float32),
        'b2': 0.1 * jax.random.normal(k4, (c_out,), jnp.float32),
    }
    x = jax.random.normal(kx, (B, c_in, H, W), jnp.float32)

    fwd = jax.jit(aorta_forward, static_argnames="groups")
    y, pooled = jax.block_until_ready(fwd(x, params, groups=groups))

    # sanity check against an independent lax.conv reference
    # (bf16 MXU inputs / bf16 stage boundary vs an f32 HIGHEST-precision reference)
    y_ref, pooled_ref = reference_forward(x, params, groups)
    np.testing.assert_allclose(np.asarray(y), np.asarray(y_ref), rtol=3e-2, atol=3e-2)
    np.testing.assert_allclose(np.asarray(pooled), np.asarray(pooled_ref), rtol=3e-2, atol=3e-2)
    assert y.shape == (B, c_out, H // 4, W // 4)
    assert pooled.shape == (B, c_out, 1, 1)
    print("KERNEL_OK")
</pallas_src>

<mosaic_0001>
module attributes {stable_mosaic.version = 11 : i64} {
  func.func @kernel(%arg0: i32, %arg1: memref<64x36xbf16, #tpu.memory_space<vmem>>, %arg2: memref<36x128xbf16, #tpu.memory_space<vmem>>, %arg3: memref<1x128xf32, #tpu.memory_space<vmem>>, %arg4: memref<1x128xf32, #tpu.memory_space<vmem>>, %arg5: memref<1x128xf32, #tpu.memory_space<vmem>>, %arg6: memref<64x128xbf16, #tpu.memory_space<vmem>>) attributes {dimension_semantics = [#tpu.dimension_semantics<parallel>], iteration_bounds = array<i64: 2>, scalar_prefetch = 0 : i64, scratch_operands = 0 : i64, tpu.core_type = #tpu.core_type<tc>, window_params = [{transform_indices = @transform_0, window_bounds = array<i64: 64, 36>}, {pipeline_mode = #tpu.pipeline_mode<synchronous>, transform_indices = @transform_1, window_bounds = array<i64: 36, 128>}, {pipeline_mode = #tpu.pipeline_mode<synchronous>, transform_indices = @transform_2, window_bounds = array<i64: 1, 128>}, {pipeline_mode = #tpu.pipeline_mode<synchronous>, transform_indices = @transform_3, window_bounds = array<i64: 1, 128>}, {pipeline_mode = #tpu.pipeline_mode<synchronous>, transform_indices = @transform_4, window_bounds = array<i64: 1, 128>}, {transform_indices = @transform_5, window_bounds = array<i64: 64, 128>}]} {
    %c0 = arith.constant 0 : index
    %c0_0 = arith.constant 0 : index
    %0 = vector.load %arg1[%c0, %c0_0] : memref<64x36xbf16, #tpu.memory_space<vmem>>, vector<64x36xbf16>
    %c0_1 = arith.constant 0 : index
    %c0_2 = arith.constant 0 : index
    %1 = vector.load %arg2[%c0_1, %c0_2] : memref<36x128xbf16, #tpu.memory_space<vmem>>, vector<36x128xbf16>
    %cst = arith.constant dense<0.000000e+00> : vector<64x128xf32>
    %2 = tpu.matmul %0, %1, %cst {dimension_numbers = #tpu.dot_dimension_numbers<[1], [0], [0], [1], [0, 0, 1, 1], [], []>} : vector<64x36xbf16>, vector<36x128xbf16>, vector<64x128xf32> -> vector<64x128xf32>
    %c0_3 = arith.constant 0 : index
    %c0_4 = arith.constant 0 : index
    %3 = vector.load %arg3[%c0_3, %c0_4] : memref<1x128xf32, #tpu.memory_space<vmem>>, vector<1x128xf32>
    %4 = vector.broadcast %3 : vector<1x128xf32> to vector<64x128xf32>
    %5 = arith.addf %2, %4 : vector<64x128xf32>
    %cst_5 = arith.constant dense<0.000000e+00> : vector<64xf32>
    %6 = vector.multi_reduction <add>, %5, %cst_5 [1] : vector<64x128xf32> to vector<64xf32>
    %7 = vector.shape_cast %6 : vector<64xf32> to vector<64x1xf32>
    %cst_6 = arith.constant 1.250000e-01 : f32
    %8 = vector.broadcast %cst_6 : f32 to vector<64x1xf32>
    %9 = arith.mulf %7, %8 : vector<64x1xf32>
    %10 = vector.broadcast %9 : vector<64x1xf32> to vector<64x128xf32>
    %11 = arith.subf %5, %10 : vector<64x128xf32>
    %12 = tpu.iota {dimensions = array<i32: 1>} : vector<64x128xi32>
    %c8_i32 = arith.constant 8 : i32
    %13 = vector.broadcast %c8_i32 : i32 to vector<64x128xi32>
    %14 = arith.cmpi slt, %12, %13 : vector<64x128xi32>
    %15 = arith.mulf %11, %11 : vector<64x128xf32>
    %cst_7 = arith.constant 0.000000e+00 : f32
    %16 = vector.broadcast %cst_7 : f32 to vector<64x128xf32>
    %17 = arith.select %14, %15, %16 : vector<64x128xi1>, vector<64x128xf32>
    %cst_8 = arith.constant dense<0.000000e+00> : vector<64xf32>
    %18 = vector.multi_reduction <add>, %17, %cst_8 [1] : vector<64x128xf32> to vector<64xf32>
    %19 = vector.shape_cast %18 : vector<64xf32> to vector<64x1xf32>
    %cst_9 = arith.constant 1.250000e-01 : f32
    %20 = vector.broadcast %cst_9 : f32 to vector<64x1xf32>
    %21 = arith.mulf %19, %20 : vector<64x1xf32>
    %cst_10 = arith.constant 9.99999974E-6 : f32
    %22 = vector.broadcast %cst_10 : f32 to vector<64x1xf32>
    %23 = arith.addf %21, %22 : vector<64x1xf32>
    %24 = math.rsqrt %23 : vector<64x1xf32>
    %25 = vector.broadcast %24 : vector<64x1xf32> to vector<64x128xf32>
    %26 = arith.mulf %11, %25 : vector<64x128xf32>
    %c0_11 = arith.constant 0 : index
    %c0_12 = arith.constant 0 : index
    %27 = vector.load %arg4[%c0_11, %c0_12] : memref<1x128xf32, #tpu.memory_space<vmem>>, vector<1x128xf32>
    %28 = vector.broadcast %27 : vector<1x128xf32> to vector<64x128xf32>
    %29 = arith.mulf %26, %28 : vector<64x128xf32>
    %c0_13 = arith.constant 0 : index
    %c0_14 = arith.constant 0 : index
    %30 = vector.load %arg5[%c0_13, %c0_14] : memref<1x128xf32, #tpu.memory_space<vmem>>, vector<1x128xf32>
    %31 = vector.broadcast %30 : vector<1x128xf32> to vector<64x128xf32>
    %32 = arith.addf %29, %31 : vector<64x128xf32>
    %cst_15 = arith.constant 0.000000e+00 : f32
    %33 = vector.broadcast %cst_15 : f32 to vector<64x128xf32>
    %34 = arith.minimumf %32, %33 : vector<64x128xf32>
    %35 = math.exp %34 : vector<64x128xf32>
    %cst_16 = arith.constant 1.000000e+00 : f32
    %36 = vector.broadcast %cst_16 : f32 to vector<64x128xf32>
    %37 = arith.subf %35, %36 : vector<64x128xf32>
    %cst_17 = arith.constant 1.67326319 : f32
    %38 = vector.broadcast %cst_17 : f32 to vector<64x128xf32>
    %39 = arith.mulf %38, %37 : vector<64x128xf32>
    %cst_18 = arith.constant 0.000000e+00 : f32
    %40 = vector.broadcast %cst_18 : f32 to vector<64x128xf32>
    %41 = arith.cmpf ogt, %32, %40 : vector<64x128xf32>
    %42 = arith.select %41, %32, %39 : vector<64x128xi1>, vector<64x128xf32>
    %cst_19 = arith.constant 1.05070102 : f32
    %43 = vector.broadcast %cst_19 : f32 to vector<64x128xf32>
    %44 = arith.mulf %43, %42 : vector<64x128xf32>
    %45 = arith.truncf %44 : vector<64x128xf32> to vector<64x128xbf16>
    %c0_20 = arith.constant 0 : index
    %c0_21 = arith.constant 0 : index
    %46 = vector.load %arg6[%c0_20, %c0_21] : memref<64x128xbf16, #tpu.memory_space<vmem>>, vector<64x128xbf16>
    tpu.vector_store %arg6[%c0_20, %c0_21], %45 {strides = array<i32>} : memref<64x128xbf16, #tpu.memory_space<vmem>>, vector<64x128xbf16>,
    return
  }
  func.func @transform_0(%arg0: i32) -> (i32, i32) {
    %c0_i32 = arith.constant 0 : i32
    %c0_i32_0 = arith.constant 0 : i32
    return %arg0, %c0_i32 : i32, i32
  }
  func.func @transform_1(%arg0: i32) -> (i32, i32) {
    %c0_i32 = arith.constant 0 : i32
    %c0_i32_0 = arith.constant 0 : i32
    %c0_i32_1 = arith.constant 0 : i32
    return %c0_i32, %c0_i32_0 : i32, i32
  }
  func.func @transform_2(%arg0: i32) -> (i32, i32) {
    %c0_i32 = arith.constant 0 : i32
    %c0_i32_0 = arith.constant 0 : i32
    %c0_i32_1 = arith.constant 0 : i32
    return %c0_i32, %c0_i32_0 : i32, i32
  }
  func.func @transform_3(%arg0: i32) -> (i32, i32) {
    %c0_i32 = arith.constant 0 : i32
    %c0_i32_0 = arith.constant 0 : i32
    %c0_i32_1 = arith.constant 0 : i32
    return %c0_i32, %c0_i32_0 : i32, i32
  }
  func.func @transform_4(%arg0: i32) -> (i32, i32) {
    %c0_i32 = arith.constant 0 : i32
    %c0_i32_0 = arith.constant 0 : i32
    %c0_i32_1 = arith.constant 0 : i32
    return %c0_i32, %c0_i32_0 : i32, i32
  }
  func.func @transform_5(%arg0: i32) -> (i32, i32) {
    %c0_i32 = arith.constant 0 : i32
    %c0_i32_0 = arith.constant 0 : i32
    return %arg0, %c0_i32 : i32, i32
  }
}

module attributes {stable_mosaic.version = 11 : i64} {
  func.func @kernel(%arg0: i32, %arg1: i32, %arg2: memref<6x4x8x128xbf16, #tpu.memory_space<vmem>>, %arg3: memref<3x1x8x128xbf16, #tpu.memory_space<vmem>>, %arg4: memref<9x128x128xbf16, #tpu.memory_space<vmem>>, %arg5: memref<1x128xf32, #tpu.memory_space<vmem>>, %arg6: memref<1x4x8x128xf32, #tpu.memory_space<vmem>>, %arg7: memref<1x1x1x128xf32, #tpu.memory_space<vmem>>) attributes {dimension_semantics = [#tpu.dimension_semantics<parallel>, #tpu.dimension_semantics<parallel>], iteration_bounds = array<i64: 2, 1>, scalar_prefetch = 0 : i64, scratch_operands = 0 : i64, tpu.core_type = #tpu.core_type<tc>, window_params = [{transform_indices = @transform_0, window_bounds = array<i64: 6, 4, 8, 128>}, {transform_indices = @transform_1, window_bounds = array<i64: 3, 1, 8, 128>}, {pipeline_mode = #tpu.pipeline_mode<synchronous>, transform_indices = @transform_2, window_bounds = array<i64: 9, 128, 128>}, {pipeline_mode = #tpu.pipeline_mode<synchronous>, transform_indices = @transform_3, window_bounds = array<i64: 1, 128>}, {transform_indices = @transform_4, window_bounds = array<i64: 1, 4, 8, 128>}, {transform_indices = @transform_5, window_bounds = array<i64: 1, 1, 1, 128>}]} {
    %cst = arith.constant 0.000000e+00 : f32
    %0 = vector.broadcast %cst : f32 to vector<32x128xf32>
    %c0 = arith.constant 0 : index
    %c0_0 = arith.constant 0 : index
    %c0_1 = arith.constant 0 : index
    %c0_2 = arith.constant 0 : index
    %1 = vector.load %arg2[%c0, %c0_0, %c0_1, %c0_2] : memref<6x4x8x128xbf16, #tpu.memory_space<vmem>>, vector<1x4x8x128xbf16>
    %2 = vector.shape_cast %1 : vector<1x4x8x128xbf16> to vector<4x8x128xbf16>
    %c0_3 = arith.constant 0 : index
    %c0_4 = arith.constant 0 : index
    %c0_5 = arith.constant 0 : index
    %c0_6 = arith.constant 0 : index
    %3 = vector.load %arg3[%c0_3, %c0_4, %c0_5, %c0_6] : memref<3x1x8x128xbf16, #tpu.memory_space<vmem>>, vector<1x1x8x128xbf16>
    %4 = vector.shape_cast %3 : vector<1x1x8x128xbf16> to vector<1x8x128xbf16>
    %5 = tpu.concatenate %2, %4 in 0 : vector<4x8x128xbf16>, vector<1x8x128xbf16> -> vector<5x8x128xbf16>
    %6 = vector.shape_cast %2 : vector<4x8x128xbf16> to vector<32x128xbf16>
    %c0_7 = arith.constant 0 : index
    %c0_8 = arith.constant 0 : index
    %c0_9 = arith.constant 0 : index
    %7 = vector.load %arg4[%c0_7, %c0_8, %c0_9] : memref<9x128x128xbf16, #tpu.memory_space<vmem>>, vector<1x128x128xbf16>
    %8 = vector.shape_cast %7 : vector<1x128x128xbf16> to vector<128x128xbf16>
    %cst_10 = arith.constant dense<0.000000e+00> : vector<32x128xf32>
    %9 = tpu.matmul %6, %8, %cst_10 {dimension_numbers = #tpu.dot_dimension_numbers<[1], [0], [0], [1], [0, 0, 1, 1], [], []>} : vector<32x128xbf16>, vector<128x128xbf16>, vector<32x128xf32> -> vector<32x128xf32>
    %10 = arith.addf %0, %9 : vector<32x128xf32>
    %11 = vector.extract_strided_slice %5 {offsets = [1, 0, 0], sizes = [4, 8, 128], strides = [1, 1, 1]} : vector<5x8x128xbf16> to vector<4x8x128xbf16>
    %12 = vector.shape_cast %11 : vector<4x8x128xbf16> to vector<32x128xbf16>
    %c6 = arith.constant 6 : index
    %c0_11 = arith.constant 0 : index
    %c0_12 = arith.constant 0 : index
    %13 = vector.load %arg4[%c6, %c0_11, %c0_12] : memref<9x128x128xbf16, #tpu.memory_space<vmem>>, vector<1x128x128xbf16>
    %14 = vector.shape_cast %13 : vector<1x128x128xbf16> to vector<128x128xbf16>
    %cst_13 = arith.constant dense<0.000000e+00> : vector<32x128xf32>
    %15 = tpu.matmul %12, %14, %cst_13 {dimension_numbers = #tpu.dot_dimension_numbers<[1], [0], [0], [1], [0, 0, 1, 1], [], []>} : vector<32x128xbf16>, vector<128x128xbf16>, vector<32x128xf32> -> vector<32x128xf32>
    %16 = arith.addf %10, %15 : vector<32x128xf32>
    %c1 = arith.constant 1 : index
    %c0_14 = arith.constant 0 : index
    %c0_15 = arith.constant 0 : index
    %c0_16 = arith.constant 0 : index
    %17 = vector.load %arg2[%c1, %c0_14, %c0_15, %c0_16] : memref<6x4x8x128xbf16, #tpu.memory_space<vmem>>, vector<1x4x8x128xbf16>
    %18 = vector.shape_cast %17 : vector<1x4x8x128xbf16> to vector<4x8x128xbf16>
    %c1_17 = arith.constant 1 : index
    %c0_18 = arith.constant 0 : index
    %c0_19 = arith.constant 0 : index
    %c0_20 = arith.constant 0 : index
    %19 = vector.load %arg3[%c1_17, %c0_18, %c0_19, %c0_20] : memref<3x1x8x128xbf16, #tpu.memory_space<vmem>>, vector<1x1x8x128xbf16>
    %20 = vector.shape_cast %19 : vector<1x1x8x128xbf16> to vector<1x8x128xbf16>
    %21 = tpu.concatenate %18, %20 in 0 : vector<4x8x128xbf16>, vector<1x8x128xbf16> -> vector<5x8x128xbf16>
    %22 = vector.shape_cast %18 : vector<4x8x128xbf16> to vector<32x128xbf16>
    %c2 = arith.constant 2 : index
    %c0_21 = arith.constant 0 : index
    %c0_22 = arith.constant 0 : index
    %23 = vector.load %arg4[%c2, %c0_21, %c0_22] : memref<9x128x128xbf16, #tpu.memory_space<vmem>>, vector<1x128x128xbf16>
    %24 = vector.shape_cast %23 : vector<1x128x128xbf16> to vector<128x128xbf16>
    %cst_23 = arith.constant dense<0.000000e+00> : vector<32x128xf32>
    %25 = tpu.matmul %22, %24, %cst_23 {dimension_numbers = #tpu.dot_dimension_numbers<[1], [0], [0], [1], [0, 0, 1, 1], [], []>} : vector<32x128xbf16>, vector<128x128xbf16>, vector<32x128xf32> -> vector<32x128xf32>
    %26 = arith.addf %16, %25 : vector<32x128xf32>
    %27 = vector.extract_strided_slice %21 {offsets = [1, 0, 0], sizes = [4, 8, 128], strides = [1, 1, 1]} : vector<5x8x128xbf16> to vector<4x8x128xbf16>
    %28 = vector.shape_cast %27 : vector<4x8x128xbf16> to vector<32x128xbf16>
    %c8 = arith.constant 8 : index
    %c0_24 = arith.constant 0 : index
    %c0_25 = arith.constant 0 : index
    %29 = vector.load %arg4[%c8, %c0_24, %c0_25] : memref<9x128x128xbf16, #tpu.memory_space<vmem>>, vector<1x128x128xbf16>
    %30 = vector.shape_cast %29 : vector<1x128x128xbf16> to vector<128x128xbf16>
    %cst_26 = arith.constant dense<0.000000e+00> : vector<32x128xf32>
    %31 = tpu.matmul %28, %30, %cst_26 {dimension_numbers = #tpu.dot_dimension_numbers<[1], [0], [0], [1], [0, 0, 1, 1], [], []>} : vector<32x128xbf16>, vector<128x128xbf16>, vector<32x128xf32> -> vector<32x128xf32>
    %32 = arith.addf %26, %31 : vector<32x128xf32>
    %c2_27 = arith.constant 2 : index
    %c0_28 = arith.constant 0 : index
    %c0_29 = arith.constant 0 : index
    %c0_30 = arith.constant 0 : index
    %33 = vector.load %arg2[%c2_27, %c0_28, %c0_29, %c0_30] : memref<6x4x8x128xbf16, #tpu.memory_space<vmem>>, vector<1x4x8x128xbf16>
    %34 = vector.shape_cast %33 : vector<1x4x8x128xbf16> to vector<4x8x128xbf16>
    %c2_31 = arith.constant 2 : index
    %c0_32 = arith.constant 0 : index
    %c0_33 = arith.constant 0 : index
    %c0_34 = arith.constant 0 : index
    %35 = vector.load %arg3[%c2_31, %c0_32, %c0_33, %c0_34] : memref<3x1x8x128xbf16, #tpu.memory_space<vmem>>, vector<1x1x8x128xbf16>
    %36 = vector.shape_cast %35 : vector<1x1x8x128xbf16> to vector<1x8x128xbf16>
    %37 = tpu.concatenate %34, %36 in 0 : vector<4x8x128xbf16>, vector<1x8x128xbf16> -> vector<5x8x128xbf16>
    %38 = vector.shape_cast %34 : vector<4x8x128xbf16> to vector<32x128xbf16>
    %c1_35 = arith.constant 1 : index
    %c0_36 = arith.constant 0 : index
    %c0_37 = arith.constant 0 : index
    %39 = vector.load %arg4[%c1_35, %c0_36, %c0_37] : memref<9x128x128xbf16, #tpu.memory_space<vmem>>, vector<1x128x128xbf16>
    %40 = vector.shape_cast %39 : vector<1x128x128xbf16> to vector<128x128xbf16>
    %cst_38 = arith.constant dense<0.000000e+00> : vector<32x128xf32>
    %41 = tpu.matmul %38, %40, %cst_38 {dimension_numbers = #tpu.dot_dimension_numbers<[1], [0], [0], [1], [0, 0, 1, 1], [], []>} : vector<32x128xbf16>, vector<128x128xbf16>, vector<32x128xf32> -> vector<32x128xf32>
    %42 = arith.addf %32, %41 : vector<32x128xf32>
    %43 = vector.extract_strided_slice %37 {offsets = [1, 0, 0], sizes = [4, 8, 128], strides = [1, 1, 1]} : vector<5x8x128xbf16> to vector<4x8x128xbf16>
    %44 = vector.shape_cast %43 : vector<4x8x128xbf16> to vector<32x128xbf16>
    %c7 = arith.constant 7 : index
    %c0_39 = arith.constant 0 : index
    %c0_40 = arith.constant 0 : index
    %45 = vector.load %arg4[%c7, %c0_39, %c0_40] : memref<9x128x128xbf16, #tpu.memory_space<vmem>>, vector<1x128x128xbf16>
    %46 = vector.shape_cast %45 : vector<1x128x128xbf16> to vector<128x128xbf16>
    %cst_41 = arith.constant dense<0.000000e+00> : vector<32x128xf32>
    %47 = tpu.matmul %44, %46, %cst_41 {dimension_numbers = #tpu.dot_dimension_numbers<[1], [0], [0], [1], [0, 0, 1, 1], [], []>} : vector<32x128xbf16>, vector<128x128xbf16>, vector<32x128xf32> -> vector<32x128xf32>
    %48 = arith.addf %42, %47 : vector<32x128xf32>
    %c3 = arith.constant 3 : index
    %c0_42 = arith.constant 0 : index
    %c0_43 = arith.constant 0 : index
    %c0_44 = arith.constant 0 : index
    %49 = vector.load %arg2[%c3, %c0_42, %c0_43, %c0_44] : memref<6x4x8x128xbf16, #tpu.memory_space<vmem>>, vector<1x4x8x128xbf16>
    %50 = vector.shape_cast %49 : vector<1x4x8x128xbf16> to vector<4x8x128xbf16>
    %51 = vector.shape_cast %50 : vector<4x8x128xbf16> to vector<32x128xbf16>
    %c3_45 = arith.constant 3 : index
    %c0_46 = arith.constant 0 : index
    %c0_47 = arith.constant 0 : index
    %52 = vector.load %arg4[%c3_45, %c0_46, %c0_47] : memref<9x128x128xbf16, #tpu.memory_space<vmem>>, vector<1x128x128xbf16>
    %53 = vector.shape_cast %52 : vector<1x128x128xbf16> to vector<128x128xbf16>
    %cst_48 = arith.constant dense<0.000000e+00> : vector<32x128xf32>
    %54 = tpu.matmul %51, %53, %cst_48 {dimension_numbers = #tpu.dot_dimension_numbers<[1], [0], [0], [1], [0, 0, 1, 1], [], []>} : vector<32x128xbf16>, vector<128x128xbf16>, vector<32x128xf32> -> vector<32x128xf32>
    %55 = arith.addf %48, %54 : vector<32x128xf32>
    %c4 = arith.constant 4 : index
    %c0_49 = arith.constant 0 : index
    %c0_50 = arith.constant 0 : index
    %c0_51 = arith.constant 0 : index
    %56 = vector.load %arg2[%c4, %c0_49, %c0_50, %c0_51] : memref<6x4x8x128xbf16, #tpu.memory_space<vmem>>, vector<1x4x8x128xbf16>
    %57 = vector.shape_cast %56 : vector<1x4x8x128xbf16> to vector<4x8x128xbf16>
    %58 = vector.shape_cast %57 : vector<4x8x128xbf16> to vector<32x128xbf16>
    %c5 = arith.constant 5 : index
    %c0_52 = arith.constant 0 : index
    %c0_53 = arith.constant 0 : index
    %59 = vector.load %arg4[%c5, %c0_52, %c0_53] : memref<9x128x128xbf16, #tpu.memory_space<vmem>>, vector<1x128x128xbf16>
    %60 = vector.shape_cast %59 : vector<1x128x128xbf16> to vector<128x128xbf16>
    %cst_54 = arith.constant dense<0.000000e+00> : vector<32x128xf32>
    %61 = tpu.matmul %58, %60, %cst_54 {dimension_numbers = #tpu.dot_dimension_numbers<[1], [0], [0], [1], [0, 0, 1, 1], [], []>} : vector<32x128xbf16>, vector<128x128xbf16>, vector<32x128xf32> -> vector<32x128xf32>
    %62 = arith.addf %55, %61 : vector<32x128xf32>
    %c5_55 = arith.constant 5 : index
    %c0_56 = arith.constant 0 : index
    %c0_57 = arith.constant 0 : index
    %c0_58 = arith.constant 0 : index
    %63 = vector.load %arg2[%c5_55, %c0_56, %c0_57, %c0_58] : memref<6x4x8x128xbf16, #tpu.memory_space<vmem>>, vector<1x4x8x128xbf16>
    %64 = vector.shape_cast %63 : vector<1x4x8x128xbf16> to vector<4x8x128xbf16>
    %65 = vector.shape_cast %64 : vector<4x8x128xbf16> to vector<32x128xbf16>
    %c4_59 = arith.constant 4 : index
    %c0_60 = arith.constant 0 : index
    %c0_61 = arith.constant 0 : index
    %66 = vector.load %arg4[%c4_59, %c0_60, %c0_61] : memref<9x128x128xbf16, #tpu.memory_space<vmem>>, vector<1x128x128xbf16>
    %67 = vector.shape_cast %66 : vector<1x128x128xbf16> to vector<128x128xbf16>
    %cst_62 = arith.constant dense<0.000000e+00> : vector<32x128xf32>
    %68 = tpu.matmul %65, %67, %cst_62 {dimension_numbers = #tpu.dot_dimension_numbers<[1], [0], [0], [1], [0, 0, 1, 1], [], []>} : vector<32x128xbf16>, vector<128x128xbf16>, vector<32x128xf32> -> vector<32x128xf32>
    %69 = arith.addf %62, %68 : vector<32x128xf32>
    %c0_63 = arith.constant 0 : index
    %c0_64 = arith.constant 0 : index
    %70 = vector.load %arg5[%c0_63, %c0_64] : memref<1x128xf32, #tpu.memory_space<vmem>>, vector<1x128xf32>
    %71 = vector.broadcast %70 : vector<1x128xf32> to vector<32x128xf32>
    %72 = arith.addf %69, %71 : vector<32x128xf32>
    %cst_65 = arith.constant 0.000000e+00 : f32
    %73 = vector.broadcast %cst_65 : f32 to vector<32x128xf32>
    %74 = arith.minimumf %72, %73 : vector<32x128xf32>
    %75 = math.exp %74 : vector<32x128xf32>
    %cst_66 = arith.constant 1.000000e+00 : f32
    %76 = vector.broadcast %cst_66 : f32 to vector<32x128xf32>
    %77 = arith.subf %75, %76 : vector<32x128xf32>
    %cst_67 = arith.constant 1.67326319 : f32
    %78 = vector.broadcast %cst_67 : f32 to vector<32x128xf32>
    %79 = arith.mulf %78, %77 : vector<32x128xf32>
    %cst_68 = arith.constant 0.000000e+00 : f32
    %80 = vector.broadcast %cst_68 : f32 to vector<32x128xf32>
    %81 = arith.cmpf ogt, %72, %80 : vector<32x128xf32>
    %82 = arith.select %81, %72, %79 : vector<32x128xi1>, vector<32x128xf32>
    %cst_69 = arith.constant 1.05070102 : f32
    %83 = vector.broadcast %cst_69 : f32 to vector<32x128xf32>
    %84 = arith.mulf %83, %82 : vector<32x128xf32>
    %85 = vector.shape_cast %84 : vector<32x128xf32> to vector<4x8x128xf32>
    %86 = tpu.iota {dimensions = array<i32: 1>} : vector<4x8x128xi32>
    %c4_i32 = arith.constant 4 : i32
    %87 = vector.broadcast %c4_i32 : i32 to vector<4x8x128xi32>
    %88 = arith.cmpi slt, %86, %87 : vector<4x8x128xi32>
    %cst_70 = arith.constant 0xFF800000 : f32
    %89 = vector.broadcast %cst_70 : f32 to vector<4x8x128xf32>
    %90 = arith.select %88, %85, %89 : vector<4x8x128xi1>, vector<4x8x128xf32>
    %c0_71 = arith.constant 0 : index
    %c0_72 = arith.constant 0 : index
    %c0_73 = arith.constant 0 : index
    %c0_74 = arith.constant 0 : index
    %91 = vector.load %arg6[%c0_71, %c0_72, %c0_73, %c0_74] : memref<1x4x8x128xf32, #tpu.memory_space<vmem>>, vector<1x4x8x128xf32>
    %92 = vector.shape_cast %91 : vector<1x4x8x128xf32> to vector<4x8x128xf32>
    %93 = vector.shape_cast %90 : vector<4x8x128xf32> to vector<1x4x8x128xf32>
    tpu.vector_store %arg6[%c0_71, %c0_72, %c0_73, %c0_74], %93 {strides = array<i32>} : memref<1x4x8x128xf32, #tpu.memory_space<vmem>>, vector<1x4x8x128xf32>,
    %cst_75 = arith.constant dense<0xFF800000> : vector<4x128xf32>
    %94 = vector.multi_reduction <maximumf>, %90, %cst_75 [1] : vector<4x8x128xf32> to vector<4x128xf32>
    %cst_76 = arith.constant dense<0xFF800000> : vector<128xf32>
    %95 = vector.multi_reduction <maximumf>, %94, %cst_76 [0] : vector<4x128xf32> to vector<128xf32>
    %96 = vector.shape_cast %95 : vector<128xf32> to vector<1x128xf32>
    %c0_77 = arith.constant 0 : index
    %c0_78 = arith.constant 0 : index
    %c0_79 = arith.constant 0 : index
    %c0_80 = arith.constant 0 : index
    %97 = vector.load %arg7[%c0_77, %c0_78, %c0_79, %c0_80] : memref<1x1x1x128xf32, #tpu.memory_space<vmem>>, vector<1x1x1x128xf32>
    %98 = vector.shape_cast %97 : vector<1x1x1x128xf32> to vector<1x128xf32>
    %99 = vector.shape_cast %96 : vector<1x128xf32> to vector<1x1x1x128xf32>
    tpu.vector_store %arg7[%c0_77, %c0_78, %c0_79, %c0_80], %99 {strides = array<i32>} : memref<1x1x1x128xf32, #tpu.memory_space<vmem>>, vector<1x1x1x128xf32>,
    return
  }
  func.func @transform_0(%arg0: i32, %arg1: i32) -> (i32, i32, i32, i32) {
    %c0_i32 = arith.constant 0 : i32
    %c0_i32_0 = arith.constant 0 : i32
    %c0_i32_1 = arith.constant 0 : i32
    return %arg0, %arg1, %c0_i32, %c0_i32_0 : i32, i32, i32, i32
  }
  func.func @transform_1(%arg0: i32, %arg1: i32) -> (i32, i32, i32, i32) {
    %c2_i32 = arith.constant 2 : i32
    %0 = arith.muli %c2_i32, %arg0 : i32
    %c1_i32 = arith.constant 1 : i32
    %1 = arith.addi %arg1, %c1_i32 : i32
    %c4_i32 = arith.constant 4 : i32
    %2 = arith.muli %c4_i32, %1 : i32
    %c0_i32 = arith.constant 0 : i32
    %c0_i32_0 = arith.constant 0 : i32
    %c0_i32_1 = arith.constant 0 : i32
    return %0, %2, %c0_i32, %c0_i32_0 : i32, i32, i32, i32
  }
  func.func @transform_2(%arg0: i32, %arg1: i32) -> (i32, i32, i32) {
    %c0_i32 = arith.constant 0 : i32
    %c0_i32_0 = arith.constant 0 : i32
    %c0_i32_1 = arith.constant 0 : i32
    %c0_i32_2 = arith.constant 0 : i32
    return %c0_i32, %c0_i32_0, %c0_i32_1 : i32, i32, i32
  }
  func.func @transform_3(%arg0: i32, %arg1: i32) -> (i32, i32) {
    %c0_i32 = arith.constant 0 : i32
    %c0_i32_0 = arith.constant 0 : i32
    %c0_i32_1 = arith.constant 0 : i32
    return %c0_i32, %c0_i32_0 : i32, i32
  }
  func.func @transform_4(%arg0: i32, %arg1: i32) -> (i32, i32, i32, i32) {
    %c0_i32 = arith.constant 0 : i32
    %c0_i32_0 = arith.constant 0 : i32
    %c0_i32_1 = arith.constant 0 : i32
    return %arg0, %arg1, %c0_i32, %c0_i32_0 : i32, i32, i32, i32
  }
  func.func @transform_5(%arg0: i32, %arg1: i32) -> (i32, i32, i32, i32) {
    %c0_i32 = arith.constant 0 : i32
    %c0_i32_0 = arith.constant 0 : i32
    %c0_i32_1 = arith.constant 0 : i32
    return %arg0, %arg1, %c0_i32, %c0_i32_0 : i32, i32, i32, i32
  }
}

</mosaic_0001>

<llo_original>
// kernel: aorta_forward.2
$region0: #{aorta_forward.2}
  #allocation0 [shape = 'u32[]', space=smem, size = 0x4, offset = 0x4, fixed_abs, tag = 'smem constant byte address 0x4 - core index']
  #allocation1 [shape = 'u32[144,128]{1,0:T(1,128)}', space=vmem, size = 0x12000, scoped, tag = 'internal scratch']
  %s0 = inlined_call_operand.vmem [shape: bf16[128,36], index: 0, kind: input, shape index: {}]
  %s1 = inlined_call_operand.vmem [shape: bf16[36,128], index: 1, kind: input, shape index: {}]
  %s2 = inlined_call_operand.vmem [shape: f32[1,128], index: 2, kind: input, shape index: {}]
  %s3 = inlined_call_operand.vmem [shape: f32[1,128], index: 3, kind: input, shape index: {}]
  %s4 = inlined_call_operand.vmem [shape: f32[1,128], index: 4, kind: input, shape index: {}]
  %s5 = inlined_call_operand.vmem [shape: bf16[128,128], index: 5, kind: output, shape index: {}]
  %s6 = sld [smem:[#allocation0]]
  $region53: #{aorta_forward.2} parent=0
    _
  %s8 = ssub.s32 1, %s6
  %s9 = scalar_select 0, %s8, %s6
  loop: start=0, step=1, limit=4
  $region2: #{aorta_forward.2} parent=0 // loop_pre_header
    _
  $region3: #{aorta_forward.2} parent=0 // loop_header
    %s11 = sphi 0, %s15
    %p12 = scmp.ge.s32.totalorder %s11, 4
    %s21 = sphi 0, %s23
    %s24 = sphi 0, %s21
    %s25 = sphi 0, %s24
    %s41 = sphi 0, %s25
    %s45 = sphi 0, %s45
    %s47 = sphi 0, %s45
    %s48 = sphi 0, %s47
    %s62 = sphi 0, %s48
    %s66 = sphi 0, %s66
    %s68 = sphi 0, %s66
    %s69 = sphi 0, %s68
    %s83 = sphi 0, %s69
    %s87 = sphi 0, %s87
    %s89 = sphi 0, %s87
    %s90 = sphi 0, %s89
    %s104 = sphi 0, %s90
    %s108 = sphi 0, %s108
    %s110 = sphi 0, %s108
    %s111 = sphi 0, %s110
    %s125 = sphi 0, %s111
    %s131 = sphi 0, %s133
    %s134 = sphi 0, %s131
    %s135 = sphi 0, %s134
    %s151 = sphi 0, %s135
  $region4: #{aorta_forward.2} parent=0 // loop_header_branch
    %14 = sbr.rel (%p12) target = $region8
  $region5: #{aorta_forward.2} parent=0 // loop_body
    %s16 = ssub.s32 %s11, 1
    %s17 = ssub.s32 %s11, 2
    %s18 = sadd.s32 %s11, 1
    %s19 = ssub.s32 %s11, %s18
    %p20 = scmp.eq.s32.totalorder %s19, 0
    %s22 = sadd.s32 %s21, 1
    %s23 = scalar_select %p20, %s21, %s22
    %p26 = pneg %p20
    %p27 = scmp.eq.s32.totalorder %s11, 1
    %p28 = por %p26, %p27
    %p29 = scmp.ne.s32.totalorder %s21, %s24
    %p30 = scmp.eq.s32.totalorder %s11, 0
    %p31 = por %p29, %p30
    %p32 = scmp.ne.s32.totalorder %s21, %s24
    %p33 = scmp.eq.s32.totalorder %s16, 1
    %p34 = por %p32, %p33
    %p35 = scmp.ne.s32.totalorder %s24, %s25
    %p36 = scmp.eq.s32.totalorder %s16, 0
    %p37 = por %p35, %p36
    %p38 = scmp.ne.s32.totalorder %s24, %s25
    %p39 = scmp.eq.s32.totalorder %s17, 1
    %p40 = por %p38, %p39
    %p42 = scmp.ne.s32.totalorder %s25, %s41
    %p43 = scmp.eq.s32.totalorder %s17, 0
    %p44 = por %p42, %p43
    %s46 = sadd.s32 %s45, 1
    %p49 = scmp.eq.s32.totalorder %s11, 1
    %p50 = scmp.ne.s32.totalorder %s45, %s47
    %p51 = scmp.eq.s32.totalorder %s11, 0
    %p52 = por %p50, %p51
    %p53 = scmp.ne.s32.totalorder %s45, %s47
    %p54 = scmp.eq.s32.totalorder %s16, 1
    %p55 = por %p53, %p54
    %p56 = scmp.ne.s32.totalorder %s47, %s48
    %p57 = scmp.eq.s32.totalorder %s16, 0
    %p58 = por %p56, %p57
    %p59 = scmp.ne.s32.totalorder %s47, %s48
    %p60 = scmp.eq.s32.totalorder %s17, 1
    %p61 = por %p59, %p60
    %p63 = scmp.ne.s32.totalorder %s48, %s62
    %p64 = scmp.eq.s32.totalorder %s17, 0
    %p65 = por %p63, %p64
    %s67 = sadd.s32 %s66, 1
    %p70 = scmp.eq.s32.totalorder %s11, 1
    %p71 = scmp.ne.s32.totalorder %s66, %s68
    %p72 = scmp.eq.s32.totalorder %s11, 0
    %p73 = por %p71, %p72
    %p74 = scmp.ne.s32.totalorder %s66, %s68
    %p75 = scmp.eq.s32.totalorder %s16, 1
    %p76 = por %p74, %p75
    %p77 = scmp.ne.s32.totalorder %s68, %s69
    %p78 = scmp.eq.s32.totalorder %s16, 0
    %p79 = por %p77, %p78
    %p80 = scmp.ne.s32.totalorder %s68, %s69
    %p81 = scmp.eq.s32.totalorder %s17, 1
    %p82 = por %p80, %p81
    %p84 = scmp.ne.s32.totalorder %s69, %s83
    %p85 = scmp.eq.s32.totalorder %s17, 0
    %p86 = por %p84, %p85
    %s88 = sadd.s32 %s87, 1
    %p91 = scmp.eq.s32.totalorder %s11, 1
    %p92 = scmp.ne.s32.totalorder %s87, %s89
    %p93 = scmp.eq.s32.totalorder %s11, 0
    %p94 = por %p92, %p93
    %p95 = scmp.ne.s32.totalorder %s87, %s89
    %p96 = scmp.eq.s32.totalorder %s16, 1
    %p97 = por %p95, %p96
    %p98 = scmp.ne.s32.totalorder %s89, %s90
    %p99 = scmp.eq.s32.totalorder %s16, 0
    %p100 = por %p98, %p99
    %p101 = scmp.ne.s32.totalorder %s89, %s90
    %p102 = scmp.eq.s32.totalorder %s17, 1
    %p103 = por %p101, %p102
    %p105 = scmp.ne.s32.totalorder %s90, %s104
    %p106 = scmp.eq.s32.totalorder %s17, 0
    %p107 = por %p105, %p106
    %s109 = sadd.s32 %s108, 1
    %p112 = scmp.eq.s32.totalorder %s11, 1
    %p113 = scmp.ne.s32.totalorder %s108, %s110
    %p114 = scmp.eq.s32.totalorder %s11, 0
    %p115 = por %p113, %p114
    %p116 = scmp.ne.s32.totalorder %s108, %s110
    %p117 = scmp.eq.s32.totalorder %s16, 1
    %p118 = por %p116, %p117
    %p119 = scmp.ne.s32.totalorder %s110, %s111
    %p120 = scmp.eq.s32.totalorder %s16, 0
    %p121 = por %p119, %p120
    %p122 = scmp.ne.s32.totalorder %s110, %s111
    %p123 = scmp.eq.s32.totalorder %s17, 1
    %p124 = por %p122, %p123
    %p126 = scmp.ne.s32.totalorder %s111, %s125
    %p127 = scmp.eq.s32.totalorder %s17, 0
    %p128 = por %p126, %p127
    %s129 = ssub.s32 %s11, %s18
    %p130 = scmp.eq.s32.totalorder %s129, 0
    %s132 = sadd.s32 %s131, 1
    %s133 = scalar_select %p130, %s131, %s132
    %p136 = pneg %p130
    %p137 = scmp.eq.s32.totalorder %s11, 1
    %p138 = por %p136, %p137
    %p139 = scmp.ne.s32.totalorder %s131, %s134
    %p140 = scmp.eq.s32.totalorder %s11, 0
    %p141 = por %p139, %p140
    %p142 = scmp.ne.s32.totalorder %s131, %s134
    %p143 = scmp.eq.s32.totalorder %s16, 1
    %p144 = por %p142, %p143
    %p145 = scmp.ne.s32.totalorder %s134, %s135
    %p146 = scmp.eq.s32.totalorder %s16, 0
    %p147 = por %p145, %p146
    %p148 = scmp.ne.s32.totalorder %s134, %s135
    %p149 = scmp.eq.s32.totalorder %s17, 1
    %p150 = por %p148, %p149
    %p152 = scmp.ne.s32.totalorder %s135, %s151
    %p153 = scmp.eq.s32.totalorder %s17, 0
    %p154 = por %p152, %p153
    %p155 = scmp.le.s32.totalorder 1, %s11
    %p156 = scmp.lt.s32.totalorder %s11, 3
    %p157 = pnand %p155, %p156
    %p158 = pneg %p157
    // Predicated region
    $region9: #{aorta_forward.2} parent=5 // pred_check
      _
    $region10: #{aorta_forward.2} parent=5 // pred_check_branch
      %160 = sbr.rel (%p157) target = $region12
    $region11: #{aorta_forward.2} parent=5 // pred_region
      %s161 = ssub.s32 %s11, 1
      // Predicated region
      $region13: #{aorta_forward.2} parent=11 // pred_check
        %p162 = pneg %p58
      $region14: #{aorta_forward.2} parent=11 // pred_check_branch
        %164 = sbr.rel (%p162) target = $region16
      $region15: #{aorta_forward.2} parent=11 // pred_region
        _
      $region16: #{aorta_forward.2} parent=11 // pred_fallthru
        _
      // Predicated region
      $region17: #{aorta_forward.2} parent=11 // pred_check
        %p165 = pneg %p79
      $region18: #{aorta_forward.2} parent=11 // pred_check_branch
        %167 = sbr.rel (%p165) target = $region20
      $region19: #{aorta_forward.2} parent=11 // pred_region
        _
      $region20: #{aorta_forward.2} parent=11 // pred_fallthru
        _
      // Predicated region
      $region21: #{aorta_forward.2} parent=11 // pred_check
        %p168 = pneg %p100
      $region22: #{aorta_forward.2} parent=11 // pred_check_branch
        %170 = sbr.rel (%p168) target = $region24
      $region23: #{aorta_forward.2} parent=11 // pred_region
        _
      $region24: #{aorta_forward.2} parent=11 // pred_fallthru
        _
      // Predicated region
      $region25: #{aorta_forward.2} parent=11 // pred_check
        %p171 = pneg %p121
      $region26: #{aorta_forward.2} parent=11 // pred_check_branch
        %173 = sbr.rel (%p171) target = $region28
      $region27: #{aorta_forward.2} parent=11 // pred_region
        _
      $region28: #{aorta_forward.2} parent=11 // pred_fallthru
        _
    $region12: #{aorta_forward.2} parent=5 // pred_fallthru
      _
    %p174 = scmp.lt.s32.totalorder %s11, 2
    // Predicated region
    $region29: #{aorta_forward.2} parent=5 // pred_check
      %p175 = pneg %p174
    $region30: #{aorta_forward.2} parent=5 // pred_check_branch
      %177 = sbr.rel (%p175) target = $region32
    $region31: #{aorta_forward.2} parent=5 // pred_region
      // Predicated region
      $region33: #{aorta_forward.2} parent=31 // pred_check
        %p178 = pneg %p31
      $region34: #{aorta_forward.2} parent=31 // pred_check_branch
        %180 = sbr.rel (%p178) target = $region36
      $region35: #{aorta_forward.2} parent=31 // pred_region
        %s181 = smul.u32 8, %s11
        %p182 = scmp.lt.s32.totalorder %s181, 15
        %s183 = scalar_select %p182, %s181, 15
        %s184 = smul.addr %s183, 4
        %s185 = scalar_lea.vmem %s0, %s184
        %s186 = smul.u32 8, %s11
      $region36: #{aorta_forward.2} parent=31 // pred_fallthru
        _
    $region32: #{aorta_forward.2} parent=5 // pred_fallthru
      _
    %p187 = scmp.le.s32.totalorder 1, %s11
    %p188 = scmp.lt.s32.totalorder %s11, 3
    %p189 = pnand %p187, %p188
    %p190 = pneg %p189
    // Predicated region
    $region37: #{aorta_forward.2} parent=5 // pred_check
      _
    $region38: #{aorta_forward.2} parent=5 // pred_check_branch
      %192 = sbr.rel (%p189) target = $region40
    $region39: #{aorta_forward.2} parent=5 // pred_region
      %s193 = ssub.s32 %s11, 1
      %s194 = smul.u32 8, %s16
      %p195 = scmp.lt.s32.totalorder %s194, 15
      %s196 = scalar_select %p195, %s194, 15
      %s197 = smul.addr %s196, 4
      %s198 = scalar_lea.vmem %s0, %s197
      %p199 = pneg %p37
      %p200 = pneg %p34
      %p201 = pneg %p58
      %p202 = pneg %p55
      %p203 = pneg %p79
      %p204 = pneg %p76
      %p205 = pneg %p100
      %p206 = pneg %p97
      %p207 = pneg %p121
      %p208 = pneg %p118
      %p209 = pneg %p147
      %p210 = pneg %p144
      %s211 = smul.u32 8, %s16
      %p212 = scmp.lt.s32.totalorder %s211, 15
      %s213 = scalar_select %p212, %s211, 15
      %s214 = smul.addr %s213, 4
      %s215 = scalar_lea.vmem %s5, %s214
      %s216 = smul.u32 8, %s16
      %p217 = scmp.lt.s32.totalorder %s216, 15
      %s218 = scalar_select %p217, %s216, 15
      %s219 = smul.addr %s218, 4
      %s220 = scalar_lea.vmem %s0, %s219
      %s221 = smul.u32 8, %s16
      %s222 = smul.u32 8, %s16
      %p223 = scmp.lt.s32.totalorder %s222, 15
      %s224 = scalar_select %p223, %s222, 15
      %s225 = smul.addr %s224, 4
      %s226 = scalar_lea.vmem %s5, %s225
      %s227 = smul.u32 8, %s16
      %v229 = vld [vmem:[%s220] sm:$0xf]
      %v230 = vld [vmem:[%s220 + $0x4] sm:$0xf]
      %v231 = vld [vmem:[%s220 + $0x8] sm:$0xf]
      %v232 = vld [vmem:[%s220 + $0xc] sm:$0xf]
      %v233 = vld [vmem:[%s220 + $0x10] sm:$0xf]
      %v234 = vld [vmem:[%s220 + $0x14] sm:$0xf]
      %v235 = vld [vmem:[%s220 + $0x18] sm:$0xf]
      %v236 = vld [vmem:[%s220 + $0x1c] sm:$0xf]
      %v237 = vld [vmem:[%s1] sm:$0xf]
      %v238 = vld [vmem:[%s1 + $0x4] sm:$0xf]
      %v239 = vld [vmem:[%s1 + $0x8] sm:$0xf]
      %v240 = vld [vmem:[%s1 + $0xc] sm:$0xf]
      %v241 = vld [vmem:[%s1 + $0x10] sm:$0x3]
      %v242 = vld [vmem:[%s2] sm:$0x1]
      %v244 = vlaneseq
      %v245 = vshrl.u32 %v244, 7
      %v246 = vsub.s32 0, %v245
      %v247 = vrot.slane %v242, %v246
      %v257 = vunpack.c.l.b16 %v229
      %v258 = vunpack.c.l.b16 %v230
      %v259 = vunpack.c.l.b16 %v231
      %v260 = vunpack.c.l.b16 %v232
      %v261 = vunpack.c.l.b16 %v233
      %v262 = vunpack.c.l.b16 %v234
      %v263 = vunpack.c.l.b16 %v235
      %v264 = vunpack.c.l.b16 %v236
      %v265 = vpack.c.b16 %v258, %v257
      %v266 = vpack.c.b16 %v260, %v259
      %v267 = vpack.c.b16 %v262, %v261
      %v268 = vpack.c.b16 %v264, %v263
      %v274 = vunpack.c.l.b16 %v237
      %v275 = vunpack.c.l.b16 %v238
      %v276 = vunpack.c.l.b16 %v239
      %v277 = vunpack.c.l.b16 %v240
      %v278 = vunpack.c.l.b16 %v241
      %v279 = vpack.c.b16 %v275, %v274
      %v280 = vpack.c.b16 %v277, %v276
      %v281 = vpack.c.b16 %v278, %v278
      %vm284 = vcmask 293888
      %v286 = vsel %vm284, %v265, 0
      %v289 = vsel %vm284, %v266, 0
      %v292 = vsel %vm284, %v267, 0
      %v295 = vsel %vm284, %v268, 0
      %vm297 = vcmask 1041408
      %v299 = vsel %vm297, %v281, 0
      %301 = vmatprep.subr.bf16.mxu0 0
      %302 = vmatpush1.bf16.msra.mxu0 0
      %303 = vmatprep.subr.bf16.mxu0 0
      %304 = vmatpush1.bf16.msra.mxu0 0
      %305 = vmatprep.subr.bf16.mxu0 0
      %306 = vmatpush1.bf16.msra.mxu0 0
      %307 = vmatprep.subr.bf16.mxu0 0
      %308 = vmatpush1.bf16.msra.mxu0 0
      %309 = vmatprep.subr.bf16.mxu0 0
      %310 = vmatpush1.bf16.msra.mxu0 0
      %311 = vmatprep.subr.bf16.mxu0 0
      %312 = vmatpush1.bf16.msra.mxu0 %v299
      %313 = vmatprep.subr.bf16.mxu0 0
      %314 = vmatpush1.bf16.msra.mxu0 %v280
      %315 = vmatprep.subr.bf16.mxu0 0
      %316 = vmatpush1.bf16.msra.mxu0 %v279
      %317 = vmatprep.subr.bf16.mxu0 0
      %318 = vmatpush2.bf16.msra.mxu0 0
      %319 = vmatprep.subr.bf16.mxu0 0
      %320 = vmatpush2.bf16.msra.mxu0 0
      %321 = vmatprep.subr.bf16.mxu0 0
      %322 = vmatpush2.bf16.msra.mxu0 0
      %323 = vmatprep.subr.bf16.mxu0 0
      %324 = vmatpush2.bf16.msra.mxu0 0
      %325 = vmatprep.subr.bf16.mxu0 0
      %326 = vmatpush2.bf16.msra.mxu0 0
      %327 = vmatprep.subr.bf16.mxu0 0
      %328 = vmatpush2.bf16.msra.mxu0 0
      %329 = vmatprep.subr.bf16.mxu0 0
      %330 = vmatpush2.bf16.msra.mxu0 0
      %331 = vmatprep.subr.bf16.mxu0 0
      %332 = vmatpush2.bf16.msra.mxu0 0
      %333 = vmatprep.mubr.bf16.mxu0 0
      %334 = vmatmul.mubr.bf16.gmra.mxu0 %v286
      %v335 = vpop.f32.mrf.mxu0
      %v336 = vadd.f32 %v247, %v335
      %v337 = vpop.f32.mrf.mxu0
      %v338 = vpop.f32.mrf.mxu0
      %v339 = vadd.f32 %v247, %v338
      %v340 = vpop.f32.mrf.mxu0
      %341 = vmatprep.mubr.bf16.mxu0 0
      %342 = vmatmul.mubr.bf16.gmra.mxu0 %v289
      %v343 = vpop.f32.mrf.mxu0
      %v344 = vadd.f32 %v247, %v343
      %v345 = vpop.f32.mrf.mxu0
      %v346 = vpop.f32.mrf.mxu0
      %v347 = vadd.f32 %v247, %v346
      %v348 = vpop.f32.mrf.mxu0
      %349 = vmatprep.mubr.bf16.mxu0 0
      %350 = vmatmul.mubr.bf16.gmra.mxu0 %v292
      %v351 = vpop.f32.mrf.mxu0
      %v352 = vadd.f32 %v247, %v351
      %v353 = vpop.f32.mrf.mxu0
      %v354 = vpop.f32.mrf.mxu0
      %v355 = vadd.f32 %v247, %v354
      %v356 = vpop.f32.mrf.mxu0
      %357 = vmatprep.mubr.bf16.mxu0 0
      %358 = vmatmul.mubr.bf16.gmra.mxu0 %v295
      %v359 = vpop.f32.mrf.mxu0
      %v360 = vadd.f32 %v247, %v359
      %v361 = vpop.f32.mrf.mxu0
      %v362 = vpop.f32.mrf.mxu0
      %v363 = vadd.f32 %v247, %v362
      %v364 = vpop.f32.mrf.mxu0
      %365 = vdwg.mxu0
      %366 = vadd.xlane.f32.xlu0 %v336
      %v367 = vpop.xlane.xlu0 %366
      %368 = vadd.xlane.f32.xlu0 %v339
      %v369 = vpop.xlane.xlu0 %368
      %370 = vadd.xlane.f32.xlu0 %v344
      %v371 = vpop.xlane.xlu0 %370
      %372 = vadd.xlane.f32.xlu0 %v347
      %v373 = vpop.xlane.xlu0 %372
      %374 = vadd.xlane.f32.xlu0 %v352
      %v375 = vpop.xlane.xlu0 %374
      %376 = vadd.xlane.f32.xlu0 %v355
      %v377 = vpop.xlane.xlu0 %376
      %378 = vadd.xlane.f32.xlu0 %v360
      %v379 = vpop.xlane.xlu0 %378
      %380 = vadd.xlane.f32.xlu0 %v363
      %v381 = vpop.xlane.xlu0 %380
      %v382 = vmul.f32 %v367, 0.125
      %v383 = vmul.f32 %v369, 0.125
      %v384 = vmul.f32 %v371, 0.125
      %v385 = vmul.f32 %v373, 0.125
      %v386 = vmul.f32 %v375, 0.125
      %v387 = vmul.f32 %v377, 0.125
      %v388 = vmul.f32 %v379, 0.125
      %v389 = vmul.f32 %v381, 0.125
      %v390 = vsub.f32 %v336, %v382
      %v391 = vsub.f32 %v339, %v383
      %v392 = vsub.f32 %v344, %v384
      %v393 = vsub.f32 %v347, %v385
      %v394 = vsub.f32 %v352, %v386
      %v395 = vsub.f32 %v355, %v387
      %v396 = vsub.f32 %v360, %v388
      %v397 = vsub.f32 %v363, %v389
      %v398 = vlaneseq
      %v399 = vand.u32 %v398, 127
      %vm400 = vcmp.lt.s32.totalorder %v399, 8
      %v401 = vmul.f32 %v390, %v390
      %v402 = vmul.f32 %v391, %v391
      %v403 = vmul.f32 %v392, %v392
      %v404 = vmul.f32 %v393, %v393
      %v405 = vmul.f32 %v394, %v394
      %v406 = vmul.f32 %v395, %v395
      %v407 = vmul.f32 %v396, %v396
      %v408 = vmul.f32 %v397, %v397
      %v409 = vsel %vm400, %v401, 0.0
      %v410 = vsel %vm400, %v402, 0.0
      %v411 = vsel %vm400, %v403, 0.0
      %v412 = vsel %vm400, %v404, 0.0
      %v413 = vsel %vm400, %v405, 0.0
      %v414 = vsel %vm400, %v406, 0.0
      %v415 = vsel %vm400, %v407, 0.0
      %v416 = vsel %vm400, %v408, 0.0
      %417 = vadd.xlane.f32.xlu0 %v409
      %v418 = vpop.xlane.xlu0 %417
      %419 = vadd.xlane.f32.xlu0 %v410
      %v420 = vpop.xlane.xlu0 %419
      %421 = vadd.xlane.f32.xlu0 %v411
      %v422 = vpop.xlane.xlu0 %421
      %423 = vadd.xlane.f32.xlu0 %v412
      %v424 = vpop.xlane.xlu0 %423
      %425 = vadd.xlane.f32.xlu0 %v413
      %v426 = vpop.xlane.xlu0 %425
      %427 = vadd.xlane.f32.xlu0 %v414
      %v428 = vpop.xlane.xlu0 %427
      %429 = vadd.xlane.f32.xlu0 %v415
      %v430 = vpop.xlane.xlu0 %429
      %431 = vadd.xlane.f32.xlu0 %v416
      %v432 = vpop.xlane.xlu0 %431
      %v433 = vmul.f32 %v418, 0.125
      %v434 = vmul.f32 %v420, 0.125
      %v435 = vmul.f32 %v422, 0.125
      %v436 = vmul.f32 %v424, 0.125
      %v437 = vmul.f32 %v426, 0.125
      %v438 = vmul.f32 %v428, 0.125
      %v439 = vmul.f32 %v430, 0.125
      %v440 = vmul.f32 %v432, 0.125
      %v441 = vadd.f32 %v433, 1e-05
      %v442 = vadd.f32 %v434, 1e-05
      %v443 = vadd.f32 %v435, 1e-05
      %v444 = vadd.f32 %v436, 1e-05
      %v445 = vadd.f32 %v437, 1e-05
      %v446 = vadd.f32 %v438, 1e-05
      %v447 = vadd.f32 %v439, 1e-05
      %v448 = vadd.f32 %v440, 1e-05
      %v449 = vrsqrt.pop %v441
      %v450 = vrsqrt.pop %v442
      %v451 = vrsqrt.pop %v443
      %v452 = vrsqrt.pop %v444
      %v453 = vrsqrt.pop %v445
      %v454 = vrsqrt.pop %v446
      %v455 = vrsqrt.pop %v447
      %v456 = vrsqrt.pop %v448
      %v457 = vmul.f32 %v390, %v449
      %v458 = vmul.f32 %v391, %v450
      %v459 = vmul.f32 %v392, %v451
      %v460 = vmul.f32 %v393, %v452
      %v461 = vmul.f32 %v394, %v453
      %v462 = vmul.f32 %v395, %v454
      %v463 = vmul.f32 %v396, %v455
      %v464 = vmul.f32 %v397, %v456
      %v465 = vld [vmem:[%s3] sm:$0x1]
      %v467 = vlaneseq
      %v468 = vshrl.u32 %v467, 7
      %v469 = vsub.s32 0, %v468
      %v470 = vrot.slane %v465, %v469
      %v472 = vmul.f32 %v457, %v470
      %v473 = vmul.f32 %v458, %v470
      %v474 = vmul.f32 %v459, %v470
      %v475 = vmul.f32 %v460, %v470
      %v476 = vmul.f32 %v461, %v470
      %v477 = vmul.f32 %v462, %v470
      %v478 = vmul.f32 %v463, %v470
      %v479 = vmul.f32 %v464, %v470
      %v480 = vld [vmem:[%s4] sm:$0x1]
      %v482 = vlaneseq
      %v483 = vshrl.u32 %v482, 7
      %v484 = vsub.s32 0, %v483
      %v485 = vrot.slane %v480, %v484
      %v487 = vadd.f32 %v472, %v485
      %v488 = vadd.f32 %v473, %v485
      %v489 = vadd.f32 %v474, %v485
      %v490 = vadd.f32 %v475, %v485
      %v491 = vadd.f32 %v476, %v485
      %v492 = vadd.f32 %v477, %v485
      %v493 = vadd.f32 %v478, %v485
      %v494 = vadd.f32 %v479, %v485
      %v495 = vmin.f32 %v487, 0.0
      %v496 = vmin.f32 %v488, 0.0
      %v497 = vmin.f32 %v489, 0.0
      %v498 = vmin.f32 %v490, 0.0
      %v499 = vmin.f32 %v491, 0.0
      %v500 = vmin.f32 %v492, 0.0
      %v501 = vmin.f32 %v493, 0.0
      %v502 = vmin.f32 %v494, 0.0
      %v503 = vmul.f32 %v495, 1.442695
      %v504 = vpow.pop %v503
      %v505 = vmul.f32 %v496, 1.442695
      %v506 = vpow.pop %v505
      %v507 = vmul.f32 %v497, 1.442695
      %v508 = vpow.pop %v507
      %v509 = vmul.f32 %v498, 1.442695
      %v510 = vpow.pop %v509
      %v511 = vmul.f32 %v499, 1.442695
      %v512 = vpow.pop %v511
      %v513 = vmul.f32 %v500, 1.442695
      %v514 = vpow.pop %v513
      %v515 = vmul.f32 %v501, 1.442695
      %v516 = vpow.pop %v515
      %v517 = vmul.f32 %v502, 1.442695
      %v518 = vpow.pop %v517
      %v519 = vsub.f32 %v504, 1.0
      %v520 = vsub.f32 %v506, 1.0
      %v521 = vsub.f32 %v508, 1.0
      %v522 = vsub.f32 %v510, 1.0
      %v523 = vsub.f32 %v512, 1.0
      %v524 = vsub.f32 %v514, 1.0
      %v525 = vsub.f32 %v516, 1.0
      %v526 = vsub.f32 %v518, 1.0
      %v527 = vmul.f32 %v519, 1.6732632
      %v528 = vmul.f32 %v520, 1.6732632
      %v529 = vmul.f32 %v521, 1.6732632
      %v530 = vmul.f32 %v522, 1.6732632
      %v531 = vmul.f32 %v523, 1.6732632
      %v532 = vmul.f32 %v524, 1.6732632
      %v533 = vmul.f32 %v525, 1.6732632
      %v534 = vmul.f32 %v526, 1.6732632
      %vm535 = vcmp.gt.f32.partialorder %v487, 0.0
      %vm536 = vcmp.gt.f32.partialorder %v488, 0.0
      %vm537 = vcmp.gt.f32.partialorder %v489, 0.0
      %vm538 = vcmp.gt.f32.partialorder %v490, 0.0
      %vm539 = vcmp.gt.f32.partialorder %v491, 0.0
      %vm540 = vcmp.gt.f32.partialorder %v492, 0.0
      %vm541 = vcmp.gt.f32.partialorder %v493, 0.0
      %vm542 = vcmp.gt.f32.partialorder %v494, 0.0
      %v543 = vsel %vm535, %v487, %v527
      %v544 = vsel %vm536, %v488, %v528
      %v545 = vsel %vm537, %v489, %v529
      %v546 = vsel %vm538, %v490, %v530
      %v547 = vsel %vm539, %v491, %v531
      %v548 = vsel %vm540, %v492, %v532
      %v549 = vsel %vm541, %v493, %v533
      %v550 = vsel %vm542, %v494, %v534
      %v551 = vmul.f32 %v543, 1.050701
      %v552 = vmul.f32 %v544, 1.050701
      %v553 = vmul.f32 %v545, 1.050701
      %v554 = vmul.f32 %v546, 1.050701
      %v555 = vmul.f32 %v547, 1.050701
      %v556 = vmul.f32 %v548, 1.050701
      %v557 = vmul.f32 %v549, 1.050701
      %v558 = vmul.f32 %v550, 1.050701
      %v559 = vpack.c.bf16 %v552, %v551
      %v560 = vpack.c.bf16 %v554, %v553
      %v561 = vpack.c.bf16 %v556, %v555
      %v562 = vpack.c.bf16 %v558, %v557
      %v567 = vunpack.c.l.b16 %v559
      %v568 = vunpack.c.h.b16 %v559
      %v569 = vunpack.c.l.b16 %v560
      %v570 = vunpack.c.h.b16 %v560
      %v571 = vunpack.c.l.b16 %v561
      %v572 = vunpack.c.h.b16 %v561
      %v573 = vunpack.c.l.b16 %v562
      %v574 = vunpack.c.h.b16 %v562
      %v575 = vpack.c.b16 %v567, %v567
      %v576 = vpack.c.b16 %v568, %v568
      %v577 = vpack.c.b16 %v569, %v569
      %v578 = vpack.c.b16 %v570, %v570
      %v579 = vpack.c.b16 %v571, %v571
      %v580 = vpack.c.b16 %v572, %v572
      %v581 = vpack.c.b16 %v573, %v573
      %v582 = vpack.c.b16 %v574, %v574
      %591 = vst [vmem:[%s226] sm:$0xf] %v575
      %592 = vst [vmem:[%s226 + $0x4] sm:$0xf] %v576
      %593 = vst [vmem:[%s226 + $0x8] sm:$0xf] %v577
      %594 = vst [vmem:[%s226 + $0xc] sm:$0xf] %v578
      %595 = vst [vmem:[%s226 + $0x10] sm:$0xf] %v579
      %596 = vst [vmem:[%s226 + $0x14] sm:$0xf] %v580
      %597 = vst [vmem:[%s226 + $0x18] sm:$0xf] %v581
      %598 = vst [vmem:[%s226 + $0x1c] sm:$0xf] %v582
      %s599 = smul.u32 8, %s16
      %p600 = scmp.lt.s32.totalorder %s599, 15
      %s601 = scalar_select %p600, %s599, 15
      %s602 = smul.addr %s601, 4
      %s603 = scalar_lea.vmem %s5, %s602
      // Predicated region
      $region41: #{aorta_forward.2} parent=39 // pred_check
        %p604 = pneg %p144
      $region42: #{aorta_forward.2} parent=39 // pred_check_branch
        %606 = sbr.rel (%p604) target = $region44
      $region43: #{aorta_forward.2} parent=39 // pred_region
        %s607 = smul.u32 8, %s16
      $region44: #{aorta_forward.2} parent=39 // pred_fallthru
        _
    $region40: #{aorta_forward.2} parent=5 // pred_fallthru
      _
    %p608 = scmp.le.s32.totalorder 2, %s11
    // Predicated region
    $region45: #{aorta_forward.2} parent=5 // pred_check
      %p609 = pneg %p608
    $region46: #{aorta_forward.2} parent=5 // pred_check_branch
      %611 = sbr.rel (%p609) target = $region48
    $region47: #{aorta_forward.2} parent=5 // pred_region
      %s612 = ssub.s32 %s11, 2
      // Predicated region
      $region49: #{aorta_forward.2} parent=47 // pred_check
        %p613 = pneg %p150
      $region50: #{aorta_forward.2} parent=47 // pred_check_branch
        %615 = sbr.rel (%p613) target = $region52
      $region51: #{aorta_forward.2} parent=47 // pred_region
        %s616 = smul.u32 8, %s17
        %p617 = scmp.lt.s32.totalorder %s616, 15
        %s618 = scalar_select %p617, %s616, 15
        %s619 = smul.addr %s618, 4
        %s620 = scalar_lea.vmem %s5, %s619
      $region52: #{aorta_forward.2} parent=47 // pred_fallthru
        _
    $region48: #{aorta_forward.2} parent=5 // pred_fallthru
      _
  $region6: #{aorta_forward.2} parent=0 // loop_footer
    %s15 = sadd.s32 1, %s11
  $region7: #{aorta_forward.2} parent=0 // loop_footer_branch
    %10 = sbr.rel target = $region3
  $region8: #{aorta_forward.2} parent=0 // loop_exit
    _

// kernel: aorta_forward.3
$region0: #{aorta_forward.3}
  #allocation0 [shape = 'u32[]', space=smem, size = 0x4, offset = 0x4, fixed_abs, tag = 'smem constant byte address 0x4 - core index']
  #allocation1 [shape = 'u32[144,128]{1,0:T(1,128)}', space=vmem, size = 0x12000, scoped, tag = 'internal scratch']
  %s0 = inlined_call_operand.vmem [shape: bf16[12,5,8,128], index: 0, kind: input, shape index: {}, may-alias: {0,1}]
  %s1 = inlined_call_operand.vmem [shape: bf16[12,5,8,128], index: 1, kind: input, shape index: {}, may-alias: {0,1}]
  %s2 = inlined_call_operand.vmem [shape: bf16[9,128,128], index: 2, kind: input, shape index: {}]
  %s3 = inlined_call_operand.vmem [shape: f32[1,128], index: 3, kind: input, shape index: {}]
  %s4 = inlined_call_operand.vmem [shape: f32[2,4,8,128], index: 4, kind: output, shape index: {0}]
  %s5 = inlined_call_operand.hbm [shape: f32[2,1,1,128], index: 5, kind: output, shape index: {1}]
  %6 = xla_tuple %s4, %s5
  %s7 = sld [smem:[#allocation0]]
  $region160: #{aorta_forward.3} parent=0
    _
  %s9 = ssub.s32 1, %s7
  %s10 = scalar_select 0, %s9, %s7
  $region1: #{aorta_forward.3} parent=0
    #allocation2 [shape = 'u8[98304]{0}', space=vmem, size = 0x18000, scoped, tag = 'input window, operand 0']
    #allocation3 [shape = 'u8[12288]{0}', space=vmem, size = 0x3000, scoped, tag = 'input window, operand 1']
    #allocation4 [shape = 'u8[1024]{0}', space=vmem, size = 0x400, scoped, tag = 'output window, operand 1']
    #allocation5 [shape = 's32[2]{0}', space=sflag, size = 0x8, scoped, tag = 'scoped memory for aorta_forward.3']
    %11 = vsyncpa [#allocation5], 0
    %s12 = scalar_lea.sflag [#allocation5], 1
    %13 = vsyncpa %s12, 0
    loop: start=0, step=1, limit=4
    $region2: #{aorta_forward.3} parent=1 // loop_pre_header
      _
    $region3: #{aorta_forward.3} parent=1 // loop_header
      %s15 = sphi 0, %s19
      %p16 = scmp.ge.s32.totalorder %s15, 4
      %s22 = sphi 0, %s34
      %s23 = sphi 0, %s30
      %s24 = sphi 0, %s22
      %s25 = sphi 0, %s23
      %s26 = sphi 0, %s24
      %s27 = sphi 0, %s25
      %s39 = sphi 0, %s41
      %s42 = sphi 0, %s39
      %s43 = sphi 0, %s42
      %s59 = sphi 0, %s43
      %s73 = sphi 0, %s75
      %s76 = sphi 0, %s73
      %s77 = sphi 0, %s76
      %s93 = sphi 0, %s77
      %s97 = sphi 0, %s97
      %s99 = sphi 0, %s97
      %s100 = sphi 0, %s99
      %s114 = sphi 0, %s100
      %s118 = sphi 0, %s118
      %s120 = sphi 0, %s118
      %s121 = sphi 0, %s120
      %s135 = sphi 0, %s121
      %s143 = sphi 0, %s145
      %s146 = sphi 0, %s143
      %s147 = sphi 0, %s146
      %s163 = sphi 0, %s147
      %s171 = sphi 0, %s173
      %s174 = sphi 0, %s171
      %s175 = sphi 0, %s174
      %s191 = sphi 0, %s175
    $region4: #{aorta_forward.3} parent=1 // loop_header_branch
      %18 = sbr.rel (%p16) target = $region8
    $region5: #{aorta_forward.3} parent=1 // loop_body
      %s20 = ssub.s32 %s15, 1
      %s21 = ssub.s32 %s15, 2
      %s28 = sadd.s32 1, %s23
      %p29 = scmp.ge.s32.totalorder %s28, 1
      %s30 = scalar_select %p29, 0, %s28
      %s31 = sadd.s32 1, %s22
      %s32 = scalar_select %p29, %s31, %s22
      %p33 = scmp.ge.s32.totalorder %s32, 2
      %s34 = scalar_select %p33, 0, %s32
      %s35 = ssub.s32 %s22, %s34
      %s36 = ssub.s32 %s23, %s30
      %s37 = sor.u32 %s35, %s36
      %p38 = scmp.eq.s32.totalorder %s37, 0
      %s40 = sadd.s32 %s39, 1
      %s41 = scalar_select %p38, %s39, %s40
      %p44 = pneg %p38
      %p45 = scmp.eq.s32.totalorder %s15, 1
      %p46 = por %p44, %p45
      %p47 = scmp.ne.s32.totalorder %s39, %s42
      %p48 = scmp.eq.s32.totalorder %s15, 0
      %p49 = por %p47, %p48
      %p50 = scmp.ne.s32.totalorder %s39, %s42
      %p51 = scmp.eq.s32.totalorder %s20, 1
      %p52 = por %p50, %p51
      %p53 = scmp.ne.s32.totalorder %s42, %s43
      %p54 = scmp.eq.s32.totalorder %s20, 0
      %p55 = por %p53, %p54
      %p56 = scmp.ne.s32.totalorder %s42, %s43
      %p57 = scmp.eq.s32.totalorder %s21, 1
      %p58 = por %p56, %p57
      %p60 = scmp.ne.s32.totalorder %s43, %s59
      %p61 = scmp.eq.s32.totalorder %s21, 0
      %p62 = por %p60, %p61
      %s63 = smul.u32 %s22, 2
      %s64 = sadd.s32 %s23, 1
      %s65 = smul.u32 %s64, 4
      %s66 = smul.u32 %s34, 2
      %s67 = sadd.s32 %s30, 1
      %s68 = smul.u32 %s67, 4
      %s69 = ssub.s32 %s63, %s66
      %s70 = ssub.s32 %s65, %s68
      %s71 = sor.u32 %s69, %s70
      %p72 = scmp.eq.s32.totalorder %s71, 0
      %s74 = sadd.s32 %s73, 1
      %s75 = scalar_select %p72, %s73, %s74
      %p78 = pneg %p72
      %p79 = scmp.eq.s32.totalorder %s15, 1
      %p80 = por %p78, %p79
      %p81 = scmp.ne.s32.totalorder %s73, %s76
      %p82 = scmp.eq.s32.totalorder %s15, 0
      %p83 = por %p81, %p82
      %p84 = scmp.ne.s32.totalorder %s73, %s76
      %p85 = scmp.eq.s32.totalorder %s20, 1
      %p86 = por %p84, %p85
      %p87 = scmp.ne.s32.totalorder %s76, %s77
      %p88 = scmp.eq.s32.totalorder %s20, 0
      %p89 = por %p87, %p88
      %p90 = scmp.ne.s32.totalorder %s76, %s77
      %p91 = scmp.eq.s32.totalorder %s21, 1
      %p92 = por %p90, %p91
      %p94 = scmp.ne.s32.totalorder %s77, %s93
      %p95 = scmp.eq.s32.totalorder %s21, 0
      %p96 = por %p94, %p95
      %s98 = sadd.s32 %s97, 1
      %p101 = scmp.eq.s32.totalorder %s15, 1
      %p102 = scmp.ne.s32.totalorder %s97, %s99
      %p103 = scmp.eq.s32.totalorder %s15, 0
      %p104 = por %p102, %p103
      %p105 = scmp.ne.s32.totalorder %s97, %s99
      %p106 = scmp.eq.s32.totalorder %s20, 1
      %p107 = por %p105, %p106
      %p108 = scmp.ne.s32.totalorder %s99, %s100
      %p109 = scmp.eq.s32.totalorder %s20, 0
      %p110 = por %p108, %p109
      %p111 = scmp.ne.s32.totalorder %s99, %s100
      %p112 = scmp.eq.s32.totalorder %s21, 1
      %p113 = por %p111, %p112
      %p115 = scmp.ne.s32.totalorder %s100, %s114
      %p116 = scmp.eq.s32.totalorder %s21, 0
      %p117 = por %p115, %p116
      %s119 = sadd.s32 %s118, 1
      %p122 = scmp.eq.s32.totalorder %s15, 1
      %p123 = scmp.ne.s32.totalorder %s118, %s120
      %p124 = scmp.eq.s32.totalorder %s15, 0
      %p125 = por %p123, %p124
      %p126 = scmp.ne.s32.totalorder %s118, %s120
      %p127 = scmp.eq.s32.totalorder %s20, 1
      %p128 = por %p126, %p127
      %p129 = scmp.ne.s32.totalorder %s120, %s121
      %p130 = scmp.eq.s32.totalorder %s20, 0
      %p131 = por %p129, %p130
      %p132 = scmp.ne.s32.totalorder %s120, %s121
      %p133 = scmp.eq.s32.totalorder %s21, 1
      %p134 = por %p132, %p133
      %p136 = scmp.ne.s32.totalorder %s121, %s135
      %p137 = scmp.eq.s32.totalorder %s21, 0
      %p138 = por %p136, %p137
      %s139 = ssub.s32 %s22, %s34
      %s140 = ssub.s32 %s23, %s30
      %s141 = sor.u32 %s139, %s140
      %p142 = scmp.eq.s32.totalorder %s141, 0
      %s144 = sadd.s32 %s143, 1
      %s145 = scalar_select %p142, %s143, %s144
      %p148 = pneg %p142
      %p149 = scmp.eq.s32.totalorder %s15, 1
      %p150 = por %p148, %p149
      %p151 = scmp.ne.s32.totalorder %s143, %s146
      %p152 = scmp.eq.s32.totalorder %s15, 0
      %p153 = por %p151, %p152
      %p154 = scmp.ne.s32.totalorder %s143, %s146
      %p155 = scmp.eq.s32.totalorder %s20, 1
      %p156 = por %p154, %p155
      %p157 = scmp.ne.s32.totalorder %s146, %s147
      %p158 = scmp.eq.s32.totalorder %s20, 0
      %p159 = por %p157, %p158
      %p160 = scmp.ne.s32.totalorder %s146, %s147
      %p161 = scmp.eq.s32.totalorder %s21, 1
      %p162 = por %p160, %p161
      %p164 = scmp.ne.s32.totalorder %s147, %s163
      %p165 = scmp.eq.s32.totalorder %s21, 0
      %p166 = por %p164, %p165
      %s167 = ssub.s32 %s22, %s34
      %s168 = ssub.s32 %s23, %s30
      %s169 = sor.u32 %s167, %s168
      %p170 = scmp.eq.s32.totalorder %s169, 0
      %s172 = sadd.s32 %s171, 1
      %s173 = scalar_select %p170, %s171, %s172
      %p176 = pneg %p170
      %p177 = scmp.eq.s32.totalorder %s15, 1
      %p178 = por %p176, %p177
      %p179 = scmp.ne.s32.totalorder %s171, %s174
      %p180 = scmp.eq.s32.totalorder %s15, 0
      %p181 = por %p179, %p180
      %p182 = scmp.ne.s32.totalorder %s171, %s174
      %p183 = scmp.eq.s32.totalorder %s20, 1
      %p184 = por %p182, %p183
      %p185 = scmp.ne.s32.totalorder %s174, %s175
      %p186 = scmp.eq.s32.totalorder %s20, 0
      %p187 = por %p185, %p186
      %p188 = scmp.ne.s32.totalorder %s174, %s175
      %p189 = scmp.eq.s32.totalorder %s21, 1
      %p190 = por %p188, %p189
      %p192 = scmp.ne.s32.totalorder %s175, %s191
      %p193 = scmp.eq.s32.totalorder %s21, 0
      %p194 = por %p192, %p193
      %p195 = scmp.le.s32.totalorder 1, %s15
      %p196 = scmp.lt.s32.totalorder %s15, 3
      %p197 = pnand %p195, %p196
      %p198 = pneg %p197
      // Predicated region
      $region9: #{aorta_forward.3} parent=5 // pred_check
        _
      $region10: #{aorta_forward.3} parent=5 // pred_check_branch
        %200 = sbr.rel (%p197) target = $region12
      $region11: #{aorta_forward.3} parent=5 // pred_region
        %s201 = ssub.s32 %s15, 1
        // Predicated region
        $region13: #{aorta_forward.3} parent=11 // pred_check
          %p202 = pneg %p110
        $region14: #{aorta_forward.3} parent=11 // pred_check_branch
          %204 = sbr.rel (%p202) target = $region16
        $region15: #{aorta_forward.3} parent=11 // pred_region
          _
        $region16: #{aorta_forward.3} parent=11 // pred_fallthru
          _
        // Predicated region
        $region17: #{aorta_forward.3} parent=11 // pred_check
          %p205 = pneg %p131
        $region18: #{aorta_forward.3} parent=11 // pred_check_branch
          %207 = sbr.rel (%p205) target = $region20
        $region19: #{aorta_forward.3} parent=11 // pred_region
          _
        $region20: #{aorta_forward.3} parent=11 // pred_fallthru
          _
      $region12: #{aorta_forward.3} parent=5 // pred_fallthru
        _
      %p208 = scmp.lt.s32.totalorder %s15, 2
      // Predicated region
      $region21: #{aorta_forward.3} parent=5 // pred_check
        %p209 = pneg %p208
      $region22: #{aorta_forward.3} parent=5 // pred_check_branch
        %211 = sbr.rel (%p209) target = $region24
      $region23: #{aorta_forward.3} parent=5 // pred_region
        // Predicated region
        $region25: #{aorta_forward.3} parent=23 // pred_check
          %p212 = pneg %p49
        $region26: #{aorta_forward.3} parent=23 // pred_check_branch
          %214 = sbr.rel (%p212) target = $region28
        $region27: #{aorta_forward.3} parent=23 // pred_region
          %s215 = sand.u32 %s39, 1
          %s216 = sand.u32 %s39, 1
          %s217 = smul.addr %s216, 96
          %s218 = scalar_lea.vmem [#allocation2], %s217
          %s219 = smul.u32 6, %s22
          %s220 = smul.u32 4, %s23
          %s221 = ssub.s32 5, %s220
          %p222 = scmp.lt.s32.totalorder %s221, 4
          %s223 = scalar_select %p222, %s221, 4
          %s224 = smul.u32 384, %s223
          %p225 = scmp.ne.s32.totalorder 0, %s224
          %s226 = smul.addr %s219, 5
          %s227 = sadd.s32 %s220, %s226
          %s228 = smul.addr %s227, 4
          %s229 = scalar_lea.vmem %s0, %s228
          // Predicated region
          $region29: #{aorta_forward.3} parent=27 // pred_check
            %p230 = pneg %p225
          $region30: #{aorta_forward.3} parent=27 // pred_check_branch
            %232 = sbr.rel (%p230) target = $region32
          $region31: #{aorta_forward.3} parent=27 // pred_region
            // Predicated region
            $region33: #{aorta_forward.3} parent=31 // pred_check
              _
            $region34: #{aorta_forward.3} parent=31 // pred_check_branch
              %234 = sbr.rel target = $region36
            $region35: #{aorta_forward.3} parent=31 // pred_region
              // Predicated region
              $region55: #{aorta_forward.3} parent=35 // pred_check
                _
              $region56: #{aorta_forward.3} parent=35 // pred_check_branch
                %340 = sbr.rel (0) target = $region58
              $region57: #{aorta_forward.3} parent=35 // pred_region
                %s341 = sshrl.u32 %s223, 2
                // While loop
                $region59: #{aorta_forward.3} parent=57 // loop_pre_header
                  _
                $region60: #{aorta_forward.3} parent=57 // loop_header
                  %s343 = sphi 0, %s345
                  %p344 = scmp.ge.s32.totalorder %s343, %s341
                  %s348 = sphi 0, %s353
                  %s349 = sphi %s229, %s356
                  %s350 = sphi %s218, %s357
                $region61: #{aorta_forward.3} parent=57 // loop_header_branch
                  %347 = sbr.rel (%p344) target = $region65
                $region62: #{aorta_forward.3} parent=57 // loop_body
                  %s351 = sadd.s32 1, %s348
                  %p352 = scmp.ge.s32.totalorder %s351, %s341
                  %s353 = scalar_select %p352, 0, %s351
                  %s354 = smul.u32 %s353, 16
                  %s355 = smul.u32 %s353, 16
                  %s356 = scalar_lea.vmem %s229, %s354
                  %s357 = scalar_lea.vmem %s218, %s355 [#allocation2]
                $region63: #{aorta_forward.3} parent=57 // loop_footer
                  %s345 = sadd.s32 %s343, 1
                $region64: #{aorta_forward.3} parent=57 // loop_footer_branch
                  %342 = sbr.rel target = $region60
                $region65: #{aorta_forward.3} parent=57 // loop_exit
                  _
                %s358 = sshrl.u32 %s223, 2
                %s359 = sand.u32 %s223, 3
                %s360 = smul.u32 %s358, 4
                %s361 = smul.u32 4, %s360
                %s362 = scalar_lea.vmem %s229, %s361
                %s363 = smul.u32 4, %s360
                %s364 = scalar_lea.vmem %s218, %s363 [#allocation2]
                // While loop
                $region66: #{aorta_forward.3} parent=57 // loop_pre_header
                  _
                $region67: #{aorta_forward.3} parent=57 // loop_header
                  %s366 = sphi 0, %s368
                  %p367 = scmp.ge.s32.totalorder %s366, %s359
                  %s371 = sphi 0, %s376
                  %s372 = sphi %s362, %s379
                  %s373 = sphi %s364, %s380
                $region68: #{aorta_forward.3} parent=57 // loop_header_branch
                  %370 = sbr.rel (%p367) target = $region72
                $region69: #{aorta_forward.3} parent=57 // loop_body
                  %s374 = sadd.s32 1, %s371
                  %p375 = scmp.ge.s32.totalorder %s374, %s359
                  %s376 = scalar_select %p375, 0, %s374
                  %s377 = smul.u32 %s376, 4
                  %s378 = smul.u32 %s376, 4
                  %s379 = scalar_lea.vmem %s362, %s377
                  %s380 = scalar_lea.vmem %s364, %s378 [#allocation2]
                $region70: #{aorta_forward.3} parent=57 // loop_footer
                  %s368 = sadd.s32 %s366, 1
                $region71: #{aorta_forward.3} parent=57 // loop_footer_branch
                  %365 = sbr.rel target = $region67
                $region72: #{aorta_forward.3} parent=57 // loop_exit
                  _
                %s382 = ssub.s32 16, 1
                %s383 = sshrl.u32 %s223, 2
                // While loop
                $region73: #{aorta_forward.3} parent=57 // loop_pre_header
                  _
                $region74: #{aorta_forward.3} parent=57 // loop_header
                  %s385 = sphi 0, %s387
                  %p386 = scmp.ge.s32.totalorder %s385, %s383
                  %s390 = sphi 0, %s443
                  %s391 = sphi %s229, %s446
                  %s392 = sphi %s218, %s447
                $region75: #{aorta_forward.3} parent=57 // loop_header_branch
                  %389 = sbr.rel (%p386) target = $region79
                $region76: #{aorta_forward.3} parent=57 // loop_body
                  %v393 = vld [vmem:[%s391] sm:%s382]
                  %394 = vst [vmem:[%s392] sm:%s382] %v393
                  %v395 = vld [vmem:[%s391 + $0x4] sm:%s382]
                  %396 = vst [vmem:[%s392 + $0x4] sm:%s382] %v395
                  %v397 = vld [vmem:[%s391 + $0x8] sm:%s382]
                  %398 = vst [vmem:[%s392 + $0x8] sm:%s382] %v397
                  %v399 = vld [vmem:[%s391 + $0xc] sm:%s382]
                  %400 = vst [vmem:[%s392 + $0xc] sm:%s382] %v399
                  %v401 = vld [vmem:[%s391 + $0x14] sm:%s382]
                  %402 = vst [vmem:[%s392 + $0x10] sm:%s382] %v401
                  %v403 = vld [vmem:[%s391 + $0x18] sm:%s382]
                  %404 = vst [vmem:[%s392 + $0x14] sm:%s382] %v403
                  %v405 = vld [vmem:[%s391 + $0x1c] sm:%s382]
                  %406 = vst [vmem:[%s392 + $0x18] sm:%s382] %v405
                  %v407 = vld [vmem:[%s391 + $0x20] sm:%s382]
                  %408 = vst [vmem:[%s392 + $0x1c] sm:%s382] %v407
                  %v409 = vld [vmem:[%s391 + $0x28] sm:%s382]
                  %410 = vst [vmem:[%s392 + $0x20] sm:%s382] %v409
                  %v411 = vld [vmem:[%s391 + $0x2c] sm:%s382]
                  %412 = vst [vmem:[%s392 + $0x24] sm:%s382] %v411
                  %v413 = vld [vmem:[%s391 + $0x30] sm:%s382]
                  %414 = vst [vmem:[%s392 + $0x28] sm:%s382] %v413
                  %v415 = vld [vmem:[%s391 + $0x34] sm:%s382]
                  %416 = vst [vmem:[%s392 + $0x2c] sm:%s382] %v415
                  %v417 = vld [vmem:[%s391 + $0x3c] sm:%s382]
                  %418 = vst [vmem:[%s392 + $0x30] sm:%s382] %v417
                  %v419 = vld [vmem:[%s391 + $0x40] sm:%s382]
                  %420 = vst [vmem:[%s392 + $0x34] sm:%s382] %v419
                  %v421 = vld [vmem:[%s391 + $0x44] sm:%s382]
                  %422 = vst [vmem:[%s392 + $0x38] sm:%s382] %v421
                  %v423 = vld [vmem:[%s391 + $0x48] sm:%s382]
                  %424 = vst [vmem:[%s392 + $0x3c] sm:%s382] %v423
                  %v425 = vld [vmem:[%s391 + $0x50] sm:%s382]
                  %426 = vst [vmem:[%s392 + $0x40] sm:%s382] %v425
                  %v427 = vld [vmem:[%s391 + $0x54] sm:%s382]
                  %428 = vst [vmem:[%s392 + $0x44] sm:%s382] %v427
                  %v429 = vld [vmem:[%s391 + $0x58] sm:%s382]
                  %430 = vst [vmem:[%s392 + $0x48] sm:%s382] %v429
                  %v431 = vld [vmem:[%s391 + $0x5c] sm:%s382]
                  %432 = vst [vmem:[%s392 + $0x4c] sm:%s382] %v431
                  %v433 = vld [vmem:[%s391 + $0x64] sm:%s382]
                  %434 = vst [vmem:[%s392 + $0x50] sm:%s382] %v433
                  %v435 = vld [vmem:[%s391 + $0x68] sm:%s382]
                  %436 = vst [vmem:[%s392 + $0x54] sm:%s382] %v435
                  %v437 = vld [vmem:[%s391 + $0x6c] sm:%s382]
                  %438 = vst [vmem:[%s392 + $0x58] sm:%s382] %v437
                  %v439 = vld [vmem:[%s391 + $0x70] sm:%s382]
                  %440 = vst [vmem:[%s392 + $0x5c] sm:%s382] %v439
                  %s441 = sadd.s32 1, %s390
                  %p442 = scmp.ge.s32.totalorder %s441, %s383
                  %s443 = scalar_select %p442, 0, %s441
                  %s444 = smul.u32 %s443, 16
                  %s445 = smul.u32 %s443, 16
                  %s446 = scalar_lea.vmem %s229, %s444
                  %s447 = scalar_lea.vmem %s218, %s445 [#allocation2]
                $region77: #{aorta_forward.3} parent=57 // loop_footer
                  %s387 = sadd.s32 %s385, 1
                $region78: #{aorta_forward.3} parent=57 // loop_footer_branch
                  %384 = sbr.rel target = $region74
                $region79: #{aorta_forward.3} parent=57 // loop_exit
                  _
                %s448 = sshrl.u32 %s223, 2
                %s449 = sand.u32 %s223, 3
                %s450 = smul.u32 %s448, 4
                %s451 = smul.u32 4, %s450
                %s452 = scalar_lea.vmem %s229, %s451
                %s453 = smul.u32 4, %s450
                %s454 = scalar_lea.vmem %s218, %s453 [#allocation2]
                // While loop
                $region80: #{aorta_forward.3} parent=57 // loop_pre_header
                  _
                $region81: #{aorta_forward.3} parent=57 // loop_header
                  %s456 = sphi 0, %s458
                  %p457 = scmp.ge.s32.totalorder %s456, %s449
                  %s461 = sphi 0, %s478
                  %s462 = sphi %s452, %s481
                  %s463 = sphi %s454, %s482
                $region82: #{aorta_forward.3} parent=57 // loop_header_branch
                  %460 = sbr.rel (%p457) target = $region86
                $region83: #{aorta_forward.3} parent=57 // loop_body
                  %v464 = vld [vmem:[%s462] sm:%s382]
                  %465 = vst [vmem:[%s463] sm:%s382] %v464
                  %v466 = vld [vmem:[%s462 + $0x14] sm:%s382]
                  %467 = vst [vmem:[%s463 + $0x10] sm:%s382] %v466
                  %v468 = vld [vmem:[%s462 + $0x28] sm:%s382]
                  %469 = vst [vmem:[%s463 + $0x20] sm:%s382] %v468
                  %v470 = vld [vmem:[%s462 + $0x3c] sm:%s382]
                  %471 = vst [vmem:[%s463 + $0x30] sm:%s382] %v470
                  %v472 = vld [vmem:[%s462 + $0x50] sm:%s382]
                  %473 = vst [vmem:[%s463 + $0x40] sm:%s382] %v472
                  %v474 = vld [vmem:[%s462 + $0x64] sm:%s382]
                  %475 = vst [vmem:[%s463 + $0x50] sm:%s382] %v474
                  %s476 = sadd.s32 1, %s461
                  %p477 = scmp.ge.s32.totalorder %s476, %s449
                  %s478 = scalar_select %p477, 0, %s476
                  %s479 = smul.u32 %s478, 4
                  %s480 = smul.u32 %s478, 4
                  %s481 = scalar_lea.vmem %s452, %s479
                  %s482 = scalar_lea.vmem %s454, %s480 [#allocation2]
                $region84: #{aorta_forward.3} parent=57 // loop_footer
                  %s458 = sadd.s32 %s456, 1
                $region85: #{aorta_forward.3} parent=57 // loop_footer_branch
                  %455 = sbr.rel target = $region81
                $region86: #{aorta_forward.3} parent=57 // loop_exit
                  _
              $region58: #{aorta_forward.3} parent=35 // pred_fallthru
                _
            $region36: #{aorta_forward.3} parent=31 // pred_fallthru
              _
            // Predicated region
            $region37: #{aorta_forward.3} parent=31 // pred_check
              _
            $region38: #{aorta_forward.3} parent=31 // pred_check_branch
              %236 = sbr.rel (0) target = $region40
            $region39: #{aorta_forward.3} parent=31 // pred_region
              %s238 = ssub.s32 16, 1
              %s239 = sshrl.u32 %s223, 2
              // While loop
              $region41: #{aorta_forward.3} parent=39 // loop_pre_header
                _
              $region42: #{aorta_forward.3} parent=39 // loop_header
                %s241 = sphi 0, %s243
                %p242 = scmp.ge.s32.totalorder %s241, %s239
                %s246 = sphi 0, %s299
                %s247 = sphi %s229, %s302
                %s248 = sphi %s218, %s303
              $region43: #{aorta_forward.3} parent=39 // loop_header_branch
                %245 = sbr.rel (%p242) target = $region47
              $region44: #{aorta_forward.3} parent=39 // loop_body
                %v249 = vld [vmem:[%s247] sm:%s238]
                %250 = vst [vmem:[%s248] sm:%s238] %v249
                %v251 = vld [vmem:[%s247 + $0x4] sm:%s238]
                %252 = vst [vmem:[%s248 + $0x4] sm:%s238] %v251
                %v253 = vld [vmem:[%s247 + $0x8] sm:%s238]
                %254 = vst [vmem:[%s248 + $0x8] sm:%s238] %v253
                %v255 = vld [vmem:[%s247 + $0xc] sm:%s238]
                %256 = vst [vmem:[%s248 + $0xc] sm:%s238] %v255
                %v257 = vld [vmem:[%s247 + $0x14] sm:%s238]
                %258 = vst [vmem:[%s248 + $0x10] sm:%s238] %v257
                %v259 = vld [vmem:[%s247 + $0x18] sm:%s238]
                %260 = vst [vmem:[%s248 + $0x14] sm:%s238] %v259
                %v261 = vld [vmem:[%s247 + $0x1c] sm:%s238]
                %262 = vst [vmem:[%s248 + $0x18] sm:%s238] %v261
                %v263 = vld [vmem:[%s247 + $0x20] sm:%s238]
                %264 = vst [vmem:[%s248 + $0x1c] sm:%s238] %v263
                %v265 = vld [vmem:[%s247 + $0x28] sm:%s238]
                %266 = vst [vmem:[%s248 + $0x20] sm:%s238] %v265
                %v267 = vld [vmem:[%s247 + $0x2c] sm:%s238]
                %268 = vst [vmem:[%s248 + $0x24] sm:%s238] %v267
                %v269 = vld [vmem:[%s247 + $0x30] sm:%s238]
                %270 = vst [vmem:[%s248 + $0x28] sm:%s238] %v269
                %v271 = vld [vmem:[%s247 + $0x34] sm:%s238]
                %272 = vst [vmem:[%s248 + $0x2c] sm:%s238] %v271
                %v273 = vld [vmem:[%s247 + $0x3c] sm:%s238]
                %274 = vst [vmem:[%s248 + $0x30] sm:%s238] %v273
                %v275 = vld [vmem:[%s247 + $0x40] sm:%s238]
                %276 = vst [vmem:[%s248 + $0x34] sm:%s238] %v275
                %v277 = vld [vmem:[%s247 + $0x44] sm:%s238]
                %278 = vst [vmem:[%s248 + $0x38] sm:%s238] %v277
                %v279 = vld [vmem:[%s247 + $0x48] sm:%s238]
                %280 = vst [vmem:[%s248 + $0x3c] sm:%s238] %v279
                %v281 = vld [vmem:[%s247 + $0x50] sm:%s238]
                %282 = vst [vmem:[%s248 + $0x40] sm:%s238] %v281
                %v283 = vld [vmem:[%s247 + $0x54] sm:%s238]
                %284 = vst [vmem:[%s248 + $0x44] sm:%s238] %v283
                %v285 = vld [vmem:[%s247 + $0x58] sm:%s238]
                %286 = vst [vmem:[%s248 + $0x48] sm:%s238] %v285
                %v287 = vld [vmem:[%s247 + $0x5c] sm:%s238]
                %288 = vst [vmem:[%s248 + $0x4c] sm:%s238] %v287
                %v289 = vld [vmem:[%s247 + $0x64] sm:%s238]
                %290 = vst [vmem:[%s248 + $0x50] sm:%s238] %v289
                %v291 = vld [vmem:[%s247 + $0x68] sm:%s238]
                %292 = vst [vmem:[%s248 + $0x54] sm:%s238] %v291
                %v293 = vld [vmem:[%s247 + $0x6c] sm:%s238]
                %294 = vst [vmem:[%s248 + $0x58] sm:%s238] %v293
                %v295 = vld [vmem:[%s247 + $0x70] sm:%s238]
                %296 = vst [vmem:[%s248 + $0x5c] sm:%s238] %v295
                %s297 = sadd.s32 1, %s246
                %p298 = scmp.ge.s32.totalorder %s297, %s239
                %s299 = scalar_select %p298, 0, %s297
                %s300 = smul.u32 %s299, 16
                %s301 = smul.u32 %s299, 16
                %s302 = scalar_lea.vmem %s229, %s300
                %s303 = scalar_lea.vmem %s218, %s301 [#allocation2]
              $region45: #{aorta_forward.3} parent=39 // loop_footer
                %s243 = sadd.s32 %s241, 1
              $region46: #{aorta_forward.3} parent=39 // loop_footer_branch
                %240 = sbr.rel target = $region42
              $region47: #{aorta_forward.3} parent=39 // loop_exit
                _
              %s304 = sshrl.u32 %s223, 2
              %s305 = sand.u32 %s223, 3
              %s306 = smul.u32 %s304, 4
              %s307 = smul.u32 4, %s306
              %s308 = scalar_lea.vmem %s229, %s307
              %s309 = smul.u32 4, %s306
              %s310 = scalar_lea.vmem %s218, %s309 [#allocation2]
              // While loop
              $region48: #{aorta_forward.3} parent=39 // loop_pre_header
                _
              $region49: #{aorta_forward.3} parent=39 // loop_header
                %s312 = sphi 0, %s314
                %p313 = scmp.ge.s32.totalorder %s312, %s305
                %s317 = sphi 0, %s334
                %s318 = sphi %s308, %s337
                %s319 = sphi %s310, %s338
              $region50: #{aorta_forward.3} parent=39 // loop_header_branch
                %316 = sbr.rel (%p313) target = $region54
              $region51: #{aorta_forward.3} parent=39 // loop_body
                %v320 = vld [vmem:[%s318] sm:%s238]
                %321 = vst [vmem:[%s319] sm:%s238] %v320
                %v322 = vld [vmem:[%s318 + $0x14] sm:%s238]
                %323 = vst [vmem:[%s319 + $0x10] sm:%s238] %v322
                %v324 = vld [vmem:[%s318 + $0x28] sm:%s238]
                %325 = vst [vmem:[%s319 + $0x20] sm:%s238] %v324
                %v326 = vld [vmem:[%s318 + $0x3c] sm:%s238]
                %327 = vst [vmem:[%s319 + $0x30] sm:%s238] %v326
                %v328 = vld [vmem:[%s318 + $0x50] sm:%s238]
                %329 = vst [vmem:[%s319 + $0x40] sm:%s238] %v328
                %v330 = vld [vmem:[%s318 + $0x64] sm:%s238]
                %331 = vst [vmem:[%s319 + $0x50] sm:%s238] %v330
                %s332 = sadd.s32 1, %s317
                %p333 = scmp.ge.s32.totalorder %s332, %s305
                %s334 = scalar_select %p333, 0, %s332
                %s335 = smul.u32 %s334, 4
                %s336 = smul.u32 %s334, 4
                %s337 = scalar_lea.vmem %s308, %s335
                %s338 = scalar_lea.vmem %s310, %s336 [#allocation2]
              $region52: #{aorta_forward.3} parent=39 // loop_footer
                %s314 = sadd.s32 %s312, 1
              $region53: #{aorta_forward.3} parent=39 // loop_footer_branch
                %311 = sbr.rel target = $region49
              $region54: #{aorta_forward.3} parent=39 // loop_exit
                _
            $region40: #{aorta_forward.3} parent=31 // pred_fallthru
              _
          $region32: #{aorta_forward.3} parent=27 // pred_fallthru
            _
          %483 = vnop
        $region28: #{aorta_forward.3} parent=23 // pred_fallthru
          _
        // Predicated region
        $region87: #{aorta_forward.3} parent=23 // pred_check
          %p484 = pneg %p83
        $region88: #{aorta_forward.3} parent=23 // pred_check_branch
          %486 = sbr.rel (%p484) target = $region90
        $region89: #{aorta_forward.3} parent=23 // pred_region
          %s487 = sand.u32 %s73, 1
          %s488 = sand.u32 %s73, 1
          %s489 = smul.addr %s488, 12
          %s490 = scalar_lea.vmem [#allocation3], %s489
          %s491 = smul.u32 %s22, 2
          %s492 = sadd.s32 %s23, 1
          %s493 = smul.u32 %s492, 4
          %s494 = smul.u32 3, %s491
          %s495 = smul.addr %s494, 5
          %s496 = sadd.s32 %s493, %s495
          %s497 = smul.addr %s496, 4
          %s498 = scalar_lea.vmem %s1, %s497
          // Predicated region
          $region91: #{aorta_forward.3} parent=89 // pred_check
            _
          $region92: #{aorta_forward.3} parent=89 // pred_check_branch
            %500 = sbr.rel (0) target = $region94
          $region93: #{aorta_forward.3} parent=89 // pred_region
            // Predicated region
            $region95: #{aorta_forward.3} parent=93 // pred_check
              _
            $region96: #{aorta_forward.3} parent=93 // pred_check_branch
              %502 = sbr.rel target = $region98
            $region97: #{aorta_forward.3} parent=93 // pred_region
              // Predicated region
              $region110: #{aorta_forward.3} parent=97 // pred_check
                _
              $region111: #{aorta_forward.3} parent=97 // pred_check_branch
                %522 = sbr.rel (0) target = $region113
              $region112: #{aorta_forward.3} parent=97 // pred_region
                loop: start=0, step=1, limit=1
                $region114: #{aorta_forward.3} parent=112 // loop_pre_header
                  _
                $region115: #{aorta_forward.3} parent=112 // loop_header
                  %s524 = sphi 0, %s528
                  %p525 = scmp.ge.s32.totalorder %s524, 1
                  %s529 = sphi %s498, %s498
                  %s530 = sphi %s490, %s490
                $region116: #{aorta_forward.3} parent=112 // loop_header_branch
                  %527 = sbr.rel (%p525) target = $region120
                $region117: #{aorta_forward.3} parent=112 // loop_body
                  _
                $region118: #{aorta_forward.3} parent=112 // loop_footer
                  %s528 = sadd.s32 1, %s524
                $region119: #{aorta_forward.3} parent=112 // loop_footer_branch
                  %523 = sbr.rel target = $region115
                $region120: #{aorta_forward.3} parent=112 // loop_exit
                  _
                %s532 = ssub.s32 16, 1
                loop: start=0, step=1, limit=1
                $region121: #{aorta_forward.3} parent=112 // loop_pre_header
                  _
                $region122: #{aorta_forward.3} parent=112 // loop_header
                  %s534 = sphi 0, %s538
                  %p535 = scmp.ge.s32.totalorder %s534, 1
                  %s539 = sphi %s498, %s498
                  %s540 = sphi %s490, %s490
                $region123: #{aorta_forward.3} parent=112 // loop_header_branch
                  %537 = sbr.rel (%p535) target = $region127
                $region124: #{aorta_forward.3} parent=112 // loop_body
                  %v541 = vld [vmem:[%s539] sm:%s532]
                  %542 = vst [vmem:[%s540] sm:%s532] %v541
                  %v543 = vld [vmem:[%s539 + $0x14] sm:%s532]
                  %544 = vst [vmem:[%s540 + $0x4] sm:%s532] %v543
                  %v545 = vld [vmem:[%s539 + $0x28] sm:%s532]
                  %546 = vst [vmem:[%s540 + $0x8] sm:%s532] %v545
                $region125: #{aorta_forward.3} parent=112 // loop_footer
                  %s538 = sadd.s32 1, %s534
                $region126: #{aorta_forward.3} parent=112 // loop_footer_branch
                  %533 = sbr.rel target = $region122
                $region127: #{aorta_forward.3} parent=112 // loop_exit
                  _
              $region113: #{aorta_forward.3} parent=97 // pred_fallthru
                _
            $region98: #{aorta_forward.3} parent=93 // pred_fallthru
              _
            // Predicated region
            $region99: #{aorta_forward.3} parent=93 // pred_check
              _
            $region100: #{aorta_forward.3} parent=93 // pred_check_branch
              %504 = sbr.rel (0) target = $region102
            $region101: #{aorta_forward.3} parent=93 // pred_region
              %s506 = ssub.s32 16, 1
              loop: start=0, step=1, limit=1
              $region103: #{aorta_forward.3} parent=101 // loop_pre_header
                _
              $region104: #{aorta_forward.3} parent=101 // loop_header
                %s508 = sphi 0, %s512
                %p509 = scmp.ge.s32.totalorder %s508, 1
                %s513 = sphi %s498, %s498
                %s514 = sphi %s490, %s490
              $region105: #{aorta_forward.3} parent=101 // loop_header_branch
                %511 = sbr.rel (%p509) target = $region109
              $region106: #{aorta_forward.3} parent=101 // loop_body
                %v515 = vld [vmem:[%s513] sm:%s506]
                %516 = vst [vmem:[%s514] sm:%s506] %v515
                %v517 = vld [vmem:[%s513 + $0x14] sm:%s506]
                %518 = vst [vmem:[%s514 + $0x4] sm:%s506] %v517
                %v519 = vld [vmem:[%s513 + $0x28] sm:%s506]
                %520 = vst [vmem:[%s514 + $0x8] sm:%s506] %v519
              $region107: #{aorta_forward.3} parent=101 // loop_footer
                %s512 = sadd.s32 1, %s508
              $region108: #{aorta_forward.3} parent=101 // loop_footer_branch
                %507 = sbr.rel target = $region104
              $region109: #{aorta_forward.3} parent=101 // loop_exit
                _
            $region102: #{aorta_forward.3} parent=93 // pred_fallthru
              _
          $region94: #{aorta_forward.3} parent=89 // pred_fallthru
            _
          %547 = vnop
        $region90: #{aorta_forward.3} parent=23 // pred_fallthru
          _
      $region24: #{aorta_forward.3} parent=5 // pred_fallthru
        _
      %p548 = scmp.le.s32.totalorder 1, %s15
      %p549 = scmp.lt.s32.totalorder %s15, 3
      %p550 = pnand %p548, %p549
      %p551 = pneg %p550
      // Predicated region
      $region128: #{aorta_forward.3} parent=5 // pred_check
        _
      $region129: #{aorta_forward.3} parent=5 // pred_check_branch
        %553 = sbr.rel (%p550) target = $region131
      $region130: #{aorta_forward.3} parent=5 // pred_region
        %s554 = ssub.s32 %s15, 1
        %s555 = sand.u32 %s42, 1
        %s556 = sand.u32 %s42, 1
        %s557 = smul.addr %s556, 96
        %s558 = scalar_lea.vmem [#allocation2], %s557
        // Predicated region
        $region132: #{aorta_forward.3} parent=130 // pred_check
          %p559 = pneg %p55
        $region133: #{aorta_forward.3} parent=130 // pred_check_branch
          %561 = sbr.rel (%p559) target = $region135
        $region134: #{aorta_forward.3} parent=130 // pred_region
          _
        $region135: #{aorta_forward.3} parent=130 // pred_fallthru
          _
        %s562 = sand.u32 %s76, 1
        %s563 = sand.u32 %s76, 1
        %s564 = smul.addr %s563, 12
        %s565 = scalar_lea.vmem [#allocation3], %s564
        // Predicated region
        $region136: #{aorta_forward.3} parent=130 // pred_check
          %p566 = pneg %p89
        $region137: #{aorta_forward.3} parent=130 // pred_check_branch
          %568 = sbr.rel (%p566) target = $region139
        $region138: #{aorta_forward.3} parent=130 // pred_region
          _
        $region139: #{aorta_forward.3} parent=130 // pred_fallthru
          _
        %s569 = sand.u32 %s42, 1
        %s570 = sand.u32 %s42, 1
        %s571 = smul.addr %s570, 96
        %s572 = scalar_lea.vmem [#allocation2], %s571
        %p573 = pneg %p55
        %p574 = pneg %p52
        %s575 = sand.u32 %s76, 1
        %s576 = sand.u32 %s76, 1
        %s577 = smul.addr %s576, 12
        %s578 = scalar_lea.vmem [#allocation3], %s577
        %p579 = pneg %p89
        %p580 = pneg %p86
        %p581 = pneg %p110
        %p582 = pneg %p107
        %p583 = pneg %p131
        %p584 = pneg %p128
        %p585 = pneg %p159
        %p586 = pneg %p156
        %s587 = smul.u32 4, %s25
        %p588 = scmp.lt.s32.totalorder %s24, 1
        %s589 = scalar_select %p588, %s24, 1
        %p590 = scmp.lt.s32.totalorder %s587, 3
        %s591 = scalar_select %p590, %s587, 3
        %s592 = smul.addr %s589, 4
        %s593 = sadd.s32 %s591, %s592
        %s594 = smul.addr %s593, 8
        %s595 = scalar_lea.vmem %s4, %s594
        %p596 = pneg %p187
        %p597 = pneg %p184
        %s598 = sand.u32 %s174, 1
        %s599 = scalar_lea.sflag [#allocation5], %s598
        %s600 = sand.u32 %s174, 1
        %s601 = scalar_lea.vmem [#allocation4], %s600
        %s602 = smul.u32 6, %s24
        %s603 = smul.u32 4, %s25
        %s604 = ssub.s32 5, %s603
        %p605 = scmp.lt.s32.totalorder %s604, 4
        %s606 = scalar_select %p605, %s604, 4
        %s607 = smul.u32 384, %s606
        %s608 = smul.u32 %s24, 2
        %s609 = sadd.s32 %s25, 1
        %s610 = smul.u32 %s609, 4
        %s611 = smul.u32 3, %s608
        %s612 = smul.u32 4, %s25
        %p613 = scmp.lt.s32.totalorder %s24, 1
        %s614 = scalar_select %p613, %s24, 1
        %p615 = scmp.lt.s32.totalorder %s612, 3
        %s616 = scalar_select %p615, %s612, 3
        %s617 = smul.addr %s614, 4
        %s618 = sadd.s32 %s616, %s617
        %s619 = smul.addr %s618, 8
        %s620 = scalar_lea.vmem %s4, %s619
        %s621 = smul.u32 4, %s25
        %v623 = vld [vmem:[%s558] sm:$0xf]
        %v624 = vld [vmem:[%s558 + $0x4] sm:$0xf]
        %v625 = vld [vmem:[%s558 + $0x8] sm:$0xf]
        %v626 = vld [vmem:[%s558 + $0xc] sm:$0xf]
        %v627 = vld [vmem:[%s565] sm:$0xf]
        %v628 = vld [vmem:[%s2] sm:$0xf]
        %v629 = vld [vmem:[%s2 + $0x4] sm:$0xf]
        %v630 = vld [vmem:[%s2 + $0x8] sm:$0xf]
        %v631 = vld [vmem:[%s2 + $0xc] sm:$0xf]
        %v632 = vld [vmem:[%s2 + $0x10] sm:$0xf]
        %v633 = vld [vmem:[%s2 + $0x14] sm:$0xf]
        %v634 = vld [vmem:[%s2 + $0x18] sm:$0xf]
        %v635 = vld [vmem:[%s2 + $0x1c] sm:$0xf]
        %v636 = vld [vmem:[%s2 + $0x20] sm:$0xf]
        %v637 = vld [vmem:[%s2 + $0x24] sm:$0xf]
        %v638 = vld [vmem:[%s2 + $0x28] sm:$0xf]
        %v639 = vld [vmem:[%s2 + $0x2c] sm:$0xf]
        %v640 = vld [vmem:[%s2 + $0x30] sm:$0xf]
        %v641 = vld [vmem:[%s2 + $0x34] sm:$0xf]
        %v642 = vld [vmem:[%s2 + $0x38] sm:$0xf]
        %v643 = vld [vmem:[%s2 + $0x3c] sm:$0xf]
        %s644 = scalar_lea.vmem %s2, 384
        %v645 = vld [vmem:[%s644] sm:$0xf]
        %v646 = vld [vmem:[%s644 + $0x4] sm:$0xf]
        %v647 = vld [vmem:[%s644 + $0x8] sm:$0xf]
        %v648 = vld [vmem:[%s644 + $0xc] sm:$0xf]
        %v649 = vld [vmem:[%s644 + $0x10] sm:$0xf]
        %v650 = vld [vmem:[%s644 + $0x14] sm:$0xf]
        %v651 = vld [vmem:[%s644 + $0x18] sm:$0xf]
        %v652 = vld [vmem:[%s644 + $0x1c] sm:$0xf]
        %v653 = vld [vmem:[%s644 + $0x20] sm:$0xf]
        %v654 = vld [vmem:[%s644 + $0x24] sm:$0xf]
        %v655 = vld [vmem:[%s644 + $0x28] sm:$0xf]
        %v656 = vld [vmem:[%s644 + $0x2c] sm:$0xf]
        %v657 = vld [vmem:[%s644 + $0x30] sm:$0xf]
        %v658 = vld [vmem:[%s644 + $0x34] sm:$0xf]
        %v659 = vld [vmem:[%s644 + $0x38] sm:$0xf]
        %v660 = vld [vmem:[%s644 + $0x3c] sm:$0xf]
        %v665 = vunpack.c.l.b16 %v624
        %v666 = vunpack.c.l.b16 %v625
        %v667 = vunpack.c.l.b16 %v626
        %v668 = vunpack.c.l.b16 %v627
        %v669 = vpack.c.b16 %v666, %v665
        %v670 = vpack.c.b16 %v668, %v667
        %v689 = vunpack.c.l.b16 %v645
        %v690 = vunpack.c.l.b16 %v646
        %v691 = vunpack.c.l.b16 %v647
        %v692 = vunpack.c.l.b16 %v648
        %v693 = vunpack.c.l.b16 %v649
        %v694 = vunpack.c.l.b16 %v650
        %v695 = vunpack.c.l.b16 %v651
        %v696 = vunpack.c.l.b16 %v652
        %v697 = vunpack.c.l.b16 %v653
        %v698 = vunpack.c.l.b16 %v654
        %v699 = vunpack.c.l.b16 %v655
        %v700 = vunpack.c.l.b16 %v656
        %v701 = vunpack.c.l.b16 %v657
        %v702 = vunpack.c.l.b16 %v658
        %v703 = vunpack.c.l.b16 %v659
        %v704 = vunpack.c.l.b16 %v660
        %v705 = vpack.c.b16 %v690, %v689
        %v706 = vpack.c.b16 %v692, %v691
        %v707 = vpack.c.b16 %v694, %v693
        %v708 = vpack.c.b16 %v696, %v695
        %v709 = vpack.c.b16 %v698, %v697
        %v710 = vpack.c.b16 %v700, %v699
        %v711 = vpack.c.b16 %v702, %v701
        %v712 = vpack.c.b16 %v704, %v703
        %721 = vmatprep.subr.bf16.mxu0 0
        %722 = vmatpush1.bf16.msra.mxu0 %v712
        %723 = vmatprep.subr.bf16.mxu0 0
        %724 = vmatpush1.bf16.msra.mxu0 %v711
        %725 = vmatprep.subr.bf16.mxu0 0
        %726 = vmatpush1.bf16.msra.mxu0 %v710
        %727 = vmatprep.subr.bf16.mxu0 0
        %728 = vmatpush1.bf16.msra.mxu0 %v709
        %729 = vmatprep.subr.bf16.mxu0 0
        %730 = vmatpush1.bf16.msra.mxu0 %v708
        %731 = vmatprep.subr.bf16.mxu0 0
        %732 = vmatpush1.bf16.msra.mxu0 %v707
        %733 = vmatprep.subr.bf16.mxu0 0
        %734 = vmatpush1.bf16.msra.mxu0 %v706
        %735 = vmatprep.subr.bf16.mxu0 0
        %736 = vmatpush1.bf16.msra.mxu0 %v705
        %737 = vmatprep.subr.bf16.mxu0 0
        %738 = vmatpush2.bf16.msra.mxu0 0
        %739 = vmatprep.subr.bf16.mxu0 0
        %740 = vmatpush2.bf16.msra.mxu0 0
        %741 = vmatprep.subr.bf16.mxu0 0
        %742 = vmatpush2.bf16.msra.mxu0 0
        %743 = vmatprep.subr.bf16.mxu0 0
        %744 = vmatpush2.bf16.msra.mxu0 0
        %745 = vmatprep.subr.bf16.mxu0 0
        %746 = vmatpush2.bf16.msra.mxu0 0
        %747 = vmatprep.subr.bf16.mxu0 0
        %748 = vmatpush2.bf16.msra.mxu0 0
        %749 = vmatprep.subr.bf16.mxu0 0
        %750 = vmatpush2.bf16.msra.mxu0 0
        %751 = vmatprep.subr.bf16.mxu0 0
        %752 = vmatpush2.bf16.msra.mxu0 0
        %753 = vmatprep.mubr.bf16.mxu0 0
        %754 = vmatmul.mubr.bf16.gmra.mxu0 %v669
        %v755 = vpop.f32.mrf.mxu0
        %v756 = vadd.f32 0.0, %v755
        %v757 = vpop.f32.mrf.mxu0
        %v758 = vpop.f32.mrf.mxu0
        %v759 = vadd.f32 0.0, %v758
        %v760 = vpop.f32.mrf.mxu0
        %761 = vmatprep.mubr.bf16.mxu0 0
        %762 = vmatmul.mubr.bf16.gmra.mxu0 %v670
        %v763 = vpop.f32.mrf.mxu0
        %v764 = vadd.f32 0.0, %v763
        %v765 = vpop.f32.mrf.mxu0
        %v766 = vpop.f32.mrf.mxu0
        %v767 = vadd.f32 0.0, %v766
        %v768 = vpop.f32.mrf.mxu0
        %769 = vdwg.mxu0
        %v771 = vunpack.c.l.b16 %v623
        %v772 = vpack.c.b16 %v665, %v771
        %v773 = vpack.c.b16 %v667, %v666
        %v792 = vunpack.c.l.b16 %v628
        %v793 = vunpack.c.l.b16 %v629
        %v794 = vunpack.c.l.b16 %v630
        %v795 = vunpack.c.l.b16 %v631
        %v796 = vunpack.c.l.b16 %v632
        %v797 = vunpack.c.l.b16 %v633
        %v798 = vunpack.c.l.b16 %v634
        %v799 = vunpack.c.l.b16 %v635
        %v800 = vunpack.c.l.b16 %v636
        %v801 = vunpack.c.l.b16 %v637
        %v802 = vunpack.c.l.b16 %v638
        %v803 = vunpack.c.l.b16 %v639
        %v804 = vunpack.c.l.b16 %v640
        %v805 = vunpack.c.l.b16 %v641
        %v806 = vunpack.c.l.b16 %v642
        %v807 = vunpack.c.l.b16 %v643
        %v808 = vpack.c.b16 %v793, %v792
        %v809 = vpack.c.b16 %v795, %v794
        %v810 = vpack.c.b16 %v797, %v796
        %v811 = vpack.c.b16 %v799, %v798
        %v812 = vpack.c.b16 %v801, %v800
        %v813 = vpack.c.b16 %v803, %v802
        %v814 = vpack.c.b16 %v805, %v804
        %v815 = vpack.c.b16 %v807, %v806
        %824 = vmatprep.subr.bf16.mxu0 0
        %825 = vmatpush1.bf16.msra.mxu0 %v815
        %826 = vmatprep.subr.bf16.mxu0 0
        %827 = vmatpush1.bf16.msra.mxu0 %v814
        %828 = vmatprep.subr.bf16.mxu0 0
        %829 = vmatpush1.bf16.msra.mxu0 %v813
        %830 = vmatprep.subr.bf16.mxu0 0
        %831 = vmatpush1.bf16.msra.mxu0 %v812
        %832 = vmatprep.subr.bf16.mxu0 0
        %833 = vmatpush1.bf16.msra.mxu0 %v811
        %834 = vmatprep.subr.bf16.mxu0 0
        %835 = vmatpush1.bf16.msra.mxu0 %v810
        %836 = vmatprep.subr.bf16.mxu0 0
        %837 = vmatpush1.bf16.msra.mxu0 %v809
        %838 = vmatprep.subr.bf16.mxu0 0
        %839 = vmatpush1.bf16.msra.mxu0 %v808
        %840 = vmatprep.subr.bf16.mxu0 0
        %841 = vmatpush2.bf16.msra.mxu0 0
        %842 = vmatprep.subr.bf16.mxu0 0
        %843 = vmatpush2.bf16.msra.mxu0 0
        %844 = vmatprep.subr.bf16.mxu0 0
        %845 = vmatpush2.bf16.msra.mxu0 0
        %846 = vmatprep.subr.bf16.mxu0 0
        %847 = vmatpush2.bf16.msra.mxu0 0
        %848 = vmatprep.subr.bf16.mxu0 0
        %849 = vmatpush2.bf16.msra.mxu0 0
        %850 = vmatprep.subr.bf16.mxu0 0
        %851 = vmatpush2.bf16.msra.mxu0 0
        %852 = vmatprep.subr.bf16.mxu0 0
        %853 = vmatpush2.bf16.msra.mxu0 0
        %854 = vmatprep.subr.bf16.mxu0 0
        %855 = vmatpush2.bf16.msra.mxu0 0
        %856 = vmatprep.mubr.bf16.mxu0 0
        %857 = vmatmul.mubr.bf16.gmra.mxu0 %v772
        %v858 = vpop.f32.mrf.mxu0
        %v859 = vadd.f32 %v756, %v858
        %v860 = vpop.f32.mrf.mxu0
        %v861 = vpop.f32.mrf.mxu0
        %v862 = vadd.f32 %v759, %v861
        %v863 = vpop.f32.mrf.mxu0
        %864 = vmatprep.mubr.bf16.mxu0 0
        %865 = vmatmul.mubr.bf16.gmra.mxu0 %v773
        %v866 = vpop.f32.mrf.mxu0
        %v867 = vadd.f32 %v764, %v866
        %v868 = vpop.f32.mrf.mxu0
        %v869 = vpop.f32.mrf.mxu0
        %v870 = vadd.f32 %v767, %v869
        %v871 = vpop.f32.mrf.mxu0
        %872 = vdwg.mxu0
        %s873 = scalar_lea.vmem %s558, 16 [#allocation2]
        %v874 = vld [vmem:[%s873] sm:$0xf]
        %v875 = vld [vmem:[%s873 + $0x4] sm:$0xf]
        %v876 = vld [vmem:[%s873 + $0x8] sm:$0xf]
        %v877 = vld [vmem:[%s873 + $0xc] sm:$0xf]
        %s878 = scalar_lea.vmem %s565, 4 [#allocation3]
        %v879 = vld [vmem:[%s878] sm:$0xf]
        %s880 = scalar_lea.vmem %s2, 128
        %v881 = vld [vmem:[%s880] sm:$0xf]
        %v882 = vld [vmem:[%s880 + $0x4] sm:$0xf]
        %v883 = vld [vmem:[%s880 + $0x8] sm:$0xf]
        %v884 = vld [vmem:[%s880 + $0xc] sm:$0xf]
        %v885 = vld [vmem:[%s880 + $0x10] sm:$0xf]
        %v886 = vld [vmem:[%s880 + $0x14] sm:$0xf]
        %v887 = vld [vmem:[%s880 + $0x18] sm:$0xf]
        %v888 = vld [vmem:[%s880 + $0x1c] sm:$0xf]
        %v889 = vld [vmem:[%s880 + $0x20] sm:$0xf]
        %v890 = vld [vmem:[%s880 + $0x24] sm:$0xf]
        %v891 = vld [vmem:[%s880 + $0x28] sm:$0xf]
        %v892 = vld [vmem:[%s880 + $0x2c] sm:$0xf]
        %v893 = vld [vmem:[%s880 + $0x30] sm:$0xf]
        %v894 = vld [vmem:[%s880 + $0x34] sm:$0xf]
        %v895 = vld [vmem:[%s880 + $0x38] sm:$0xf]
        %v896 = vld [vmem:[%s880 + $0x3c] sm:$0xf]
        %v901 = vunpack.c.l.b16 %v874
        %v902 = vunpack.c.l.b16 %v875
        %v903 = vunpack.c.l.b16 %v876
        %v904 = vunpack.c.l.b16 %v877
        %v905 = vpack.c.b16 %v902, %v901
        %v906 = vpack.c.b16 %v904, %v903
        %v925 = vunpack.c.l.b16 %v881
        %v926 = vunpack.c.l.b16 %v882
        %v927 = vunpack.c.l.b16 %v883
        %v928 = vunpack.c.l.b16 %v884
        %v929 = vunpack.c.l.b16 %v885
        %v930 = vunpack.c.l.b16 %v886
        %v931 = vunpack.c.l.b16 %v887
        %v932 = vunpack.c.l.b16 %v888
        %v933 = vunpack.c.l.b16 %v889
        %v934 = vunpack.c.l.b16 %v890
        %v935 = vunpack.c.l.b16 %v891
        %v936 = vunpack.c.l.b16 %v892
        %v937 = vunpack.c.l.b16 %v893
        %v938 = vunpack.c.l.b16 %v894
        %v939 = vunpack.c.l.b16 %v895
        %v940 = vunpack.c.l.b16 %v896
        %v941 = vpack.c.b16 %v926, %v925
        %v942 = vpack.c.b16 %v928, %v927
        %v943 = vpack.c.b16 %v930, %v929
        %v944 = vpack.c.b16 %v932, %v931
        %v945 = vpack.c.b16 %v934, %v933
        %v946 = vpack.c.b16 %v936, %v935
        %v947 = vpack.c.b16 %v938, %v937
        %v948 = vpack.c.b16 %v940, %v939
        %957 = vmatprep.subr.bf16.mxu0 0
        %958 = vmatpush1.bf16.msra.mxu0 %v948
        %959 = vmatprep.subr.bf16.mxu0 0
        %960 = vmatpush1.bf16.msra.mxu0 %v947
        %961 = vmatprep.subr.bf16.mxu0 0
        %962 = vmatpush1.bf16.msra.mxu0 %v946
        %963 = vmatprep.subr.bf16.mxu0 0
        %964 = vmatpush1.bf16.msra.mxu0 %v945
        %965 = vmatprep.subr.bf16.mxu0 0
        %966 = vmatpush1.bf16.msra.mxu0 %v944
        %967 = vmatprep.subr.bf16.mxu0 0
        %968 = vmatpush1.bf16.msra.mxu0 %v943
        %969 = vmatprep.subr.bf16.mxu0 0
        %970 = vmatpush1.bf16.msra.mxu0 %v942
        %971 = vmatprep.subr.bf16.mxu0 0
        %972 = vmatpush1.bf16.msra.mxu0 %v941
        %973 = vmatprep.subr.bf16.mxu0 0
        %974 = vmatpush2.bf16.msra.mxu0 0
        %975 = vmatprep.subr.bf16.mxu0 0
        %976 = vmatpush2.bf16.msra.mxu0 0
        %977 = vmatprep.subr.bf16.mxu0 0
        %978 = vmatpush2.bf16.msra.mxu0 0
        %979 = vmatprep.subr.bf16.mxu0 0
        %980 = vmatpush2.bf16.msra.mxu0 0
        %981 = vmatprep.subr.bf16.mxu0 0
        %982 = vmatpush2.bf16.msra.mxu0 0
        %983 = vmatprep.subr.bf16.mxu0 0
        %984 = vmatpush2.bf16.msra.mxu0 0
        %985 = vmatprep.subr.bf16.mxu0 0
        %986 = vmatpush2.bf16.msra.mxu0 0
        %987 = vmatprep.subr.bf16.mxu0 0
        %988 = vmatpush2.bf16.msra.mxu0 0
        %989 = vmatprep.mubr.bf16.mxu0 0
        %990 = vmatmul.mubr.bf16.gmra.mxu0 %v905
        %v991 = vpop.f32.mrf.mxu0
        %v992 = vadd.f32 0.0, %v991
        %v993 = vpop.f32.mrf.mxu0
        %v994 = vpop.f32.mrf.mxu0
        %v995 = vadd.f32 0.0, %v994
        %v996 = vpop.f32.mrf.mxu0
        %997 = vmatprep.mubr.bf16.mxu0 0
        %998 = vmatmul.mubr.bf16.gmra.mxu0 %v906
        %v999 = vpop.f32.mrf.mxu0
        %v1000 = vadd.f32 0.0, %v999
        %v1001 = vpop.f32.mrf.mxu0
        %v1002 = vpop.f32.mrf.mxu0
        %v1003 = vadd.f32 0.0, %v1002
        %v1004 = vpop.f32.mrf.mxu0
        %1005 = vdwg.mxu0
        %v1006 = vadd.f32 %v859, %v992
        %v1007 = vadd.f32 %v862, %v995
        %v1008 = vadd.f32 %v867, %v1000
        %v1009 = vadd.f32 %v870, %v1003
        %s1010 = scalar_lea.vmem %s2, 512
        %v1011 = vld [vmem:[%s1010] sm:$0xf]
        %v1012 = vld [vmem:[%s1010 + $0x4] sm:$0xf]
        %v1013 = vld [vmem:[%s1010 + $0x8] sm:$0xf]
        %v1014 = vld [vmem:[%s1010 + $0xc] sm:$0xf]
        %v1015 = vld [vmem:[%s1010 + $0x10] sm:$0xf]
        %v1016 = vld [vmem:[%s1010 + $0x14] sm:$0xf]
        %v1017 = vld [vmem:[%s1010 + $0x18] sm:$0xf]
        %v1018 = vld [vmem:[%s1010 + $0x1c] sm:$0xf]
        %v1019 = vld [vmem:[%s1010 + $0x20] sm:$0xf]
        %v1020 = vld [vmem:[%s1010 + $0x24] sm:$0xf]
        %v1021 = vld [vmem:[%s1010 + $0x28] sm:$0xf]
        %v1022 = vld [vmem:[%s1010 + $0x2c] sm:$0xf]
        %v1023 = vld [vmem:[%s1010 + $0x30] sm:$0xf]
        %v1024 = vld [vmem:[%s1010 + $0x34] sm:$0xf]
        %v1025 = vld [vmem:[%s1010 + $0x38] sm:$0xf]
        %v1026 = vld [vmem:[%s1010 + $0x3c] sm:$0xf]
        %v1028 = vunpack.c.l.b16 %v879
        %v1029 = vpack.c.b16 %v903, %v902
        %v1030 = vpack.c.b16 %v1028, %v904
        %v1049 = vunpack.c.l.b16 %v1011
        %v1050 = vunpack.c.l.b16 %v1012
        %v1051 = vunpack.c.l.b16 %v1013
        %v1052 = vunpack.c.l.b16 %v1014
        %v1053 = vunpack.c.l.b16 %v1015
        %v1054 = vunpack.c.l.b16 %v1016
        %v1055 = vunpack.c.l.b16 %v1017
        %v1056 = vunpack.c.l.b16 %v1018
        %v1057 = vunpack.c.l.b16 %v1019
        %v1058 = vunpack.c.l.b16 %v1020
        %v1059 = vunpack.c.l.b16 %v1021
        %v1060 = vunpack.c.l.b16 %v1022
        %v1061 = vunpack.c.l.b16 %v1023
        %v1062 = vunpack.c.l.b16 %v1024
        %v1063 = vunpack.c.l.b16 %v1025
        %v1064 = vunpack.c.l.b16 %v1026
        %v1065 = vpack.c.b16 %v1050, %v1049
        %v1066 = vpack.c.b16 %v1052, %v1051
        %v1067 = vpack.c.b16 %v1054, %v1053
        %v1068 = vpack.c.b16 %v1056, %v1055
        %v1069 = vpack.c.b16 %v1058, %v1057
        %v1070 = vpack.c.b16 %v1060, %v1059
        %v1071 = vpack.c.b16 %v1062, %v1061
        %v1072 = vpack.c.b16 %v1064, %v1063
        %1081 = vmatprep.subr.bf16.mxu0 0
        %1082 = vmatpush1.bf16.msra.mxu0 %v1072
        %1083 = vmatprep.subr.bf16.mxu0 0
        %1084 = vmatpush1.bf16.msra.mxu0 %v1071
        %1085 = vmatprep.subr.bf16.mxu0 0
        %1086 = vmatpush1.bf16.msra.mxu0 %v1070
        %1087 = vmatprep.subr.bf16.mxu0 0
        %1088 = vmatpush1.bf16.msra.mxu0 %v1069
        %1089 = vmatprep.subr.bf16.mxu0 0
        %1090 = vmatpush1.bf16.msra.mxu0 %v1068
        %1091 = vmatprep.subr.bf16.mxu0 0
        %1092 = vmatpush1.bf16.msra.mxu0 %v1067
        %1093 = vmatprep.subr.bf16.mxu0 0
        %1094 = vmatpush1.bf16.msra.mxu0 %v1066
        %1095 = vmatprep.subr.bf16.mxu0 0
        %1096 = vmatpush1.bf16.msra.mxu0 %v1065
        %1097 = vmatprep.subr.bf16.mxu0 0
        %1098 = vmatpush2.bf16.msra.mxu0 0
        %1099 = vmatprep.subr.bf16.mxu0 0
        %1100 = vmatpush2.bf16.msra.mxu0 0
        %1101 = vmatprep.subr.bf16.mxu0 0
        %1102 = vmatpush2.bf16.msra.mxu0 0
        %1103 = vmatprep.subr.bf16.mxu0 0
        %1104 = vmatpush2.bf16.msra.mxu0 0
        %1105 = vmatprep.subr.bf16.mxu0 0
        %1106 = vmatpush2.bf16.msra.mxu0 0
        %1107 = vmatprep.subr.bf16.mxu0 0
        %1108 = vmatpush2.bf16.msra.mxu0 0
        %1109 = vmatprep.subr.bf16.mxu0 0
        %1110 = vmatpush2.bf16.msra.mxu0 0
        %1111 = vmatprep.subr.bf16.mxu0 0
        %1112 = vmatpush2.bf16.msra.mxu0 0
        %1113 = vmatprep.mubr.bf16.mxu0 0
        %1114 = vmatmul.mubr.bf16.gmra.mxu0 %v1029
        %v1115 = vpop.f32.mrf.mxu0
        %v1116 = vadd.f32 0.0, %v1115
        %v1117 = vpop.f32.mrf.mxu0
        %v1118 = vpop.f32.mrf.mxu0
        %v1119 = vadd.f32 0.0, %v1118
        %v1120 = vpop.f32.mrf.mxu0
        %1121 = vmatprep.mubr.bf16.mxu0 0
        %1122 = vmatmul.mubr.bf16.gmra.mxu0 %v1030
        %v1123 = vpop.f32.mrf.mxu0
        %v1124 = vadd.f32 0.0, %v1123
        %v1125 = vpop.f32.mrf.mxu0
        %v1126 = vpop.f32.mrf.mxu0
        %v1127 = vadd.f32 0.0, %v1126
        %v1128 = vpop.f32.mrf.mxu0
        %1129 = vdwg.mxu0
        %v1130 = vadd.f32 %v1006, %v1116
        %v1131 = vadd.f32 %v1007, %v1119
        %v1132 = vadd.f32 %v1008, %v1124
        %v1133 = vadd.f32 %v1009, %v1127
        %s1134 = scalar_lea.vmem %s558, 32 [#allocation2]
        %v1135 = vld [vmem:[%s1134] sm:$0xf]
        %v1136 = vld [vmem:[%s1134 + $0x4] sm:$0xf]
        %v1137 = vld [vmem:[%s1134 + $0x8] sm:$0xf]
        %v1138 = vld [vmem:[%s1134 + $0xc] sm:$0xf]
        %s1139 = scalar_lea.vmem %s565, 8 [#allocation3]
        %v1140 = vld [vmem:[%s1139] sm:$0xf]
        %s1141 = scalar_lea.vmem %s2, 64
        %v1142 = vld [vmem:[%s1141] sm:$0xf]
        %v1143 = vld [vmem:[%s1141 + $0x4] sm:$0xf]
        %v1144 = vld [vmem:[%s1141 + $0x8] sm:$0xf]
        %v1145 = vld [vmem:[%s1141 + $0xc] sm:$0xf]
        %v1146 = vld [vmem:[%s1141 + $0x10] sm:$0xf]
        %v1147 = vld [vmem:[%s1141 + $0x14] sm:$0xf]
        %v1148 = vld [vmem:[%s1141 + $0x18] sm:$0xf]
        %v1149 = vld [vmem:[%s1141 + $0x1c] sm:$0xf]
        %v1150 = vld [vmem:[%s1141 + $0x20] sm:$0xf]
        %v1151 = vld [vmem:[%s1141 + $0x24] sm:$0xf]
        %v1152 = vld [vmem:[%s1141 + $0x28] sm:$0xf]
        %v1153 = vld [vmem:[%s1141 + $0x2c] sm:$0xf]
        %v1154 = vld [vmem:[%s1141 + $0x30] sm:$0xf]
        %v1155 = vld [vmem:[%s1141 + $0x34] sm:$0xf]
        %v1156 = vld [vmem:[%s1141 + $0x38] sm:$0xf]
        %v1157 = vld [vmem:[%s1141 + $0x3c] sm:$0xf]
        %v1162 = vunpack.c.l.b16 %v1135
        %v1163 = vunpack.c.l.b16 %v1136
        %v1164 = vunpack.c.l.b16 %v1137
        %v1165 = vunpack.c.l.b16 %v1138
        %v1166 = vpack.c.b16 %v1163, %v1162
        %v1167 = vpack.c.b16 %v1165, %v1164
        %v1186 = vunpack.c.l.b16 %v1142
        %v1187 = vunpack.c.l.b16 %v1143
        %v1188 = vunpack.c.l.b16 %v1144
        %v1189 = vunpack.c.l.b16 %v1145
        %v1190 = vunpack.c.l.b16 %v1146
        %v1191 = vunpack.c.l.b16 %v1147
        %v1192 = vunpack.c.l.b16 %v1148
        %v1193 = vunpack.c.l.b16 %v1149
        %v1194 = vunpack.c.l.b16 %v1150
        %v1195 = vunpack.c.l.b16 %v1151
        %v1196 = vunpack.c.l.b16 %v1152
        %v1197 = vunpack.c.l.b16 %v1153
        %v1198 = vunpack.c.l.b16 %v1154
        %v1199 = vunpack.c.l.b16 %v1155
        %v1200 = vunpack.c.l.b16 %v1156
        %v1201 = vunpack.c.l.b16 %v1157
        %v1202 = vpack.c.b16 %v1187, %v1186
        %v1203 = vpack.c.b16 %v1189, %v1188
        %v1204 = vpack.c.b16 %v1191, %v1190
        %v1205 = vpack.c.b16 %v1193, %v1192
        %v1206 = vpack.c.b16 %v1195, %v1194
        %v1207 = vpack.c.b16 %v1197, %v1196
        %v1208 = vpack.c.b16 %v1199, %v1198
        %v1209 = vpack.c.b16 %v1201, %v1200
        %1218 = vmatprep.subr.bf16.mxu0 0
        %1219 = vmatpush1.bf16.msra.mxu0 %v1209
        %1220 = vmatprep.subr.bf16.mxu0 0
        %1221 = vmatpush1.bf16.msra.mxu0 %v1208
        %1222 = vmatprep.subr.bf16.mxu0 0
        %1223 = vmatpush1.bf16.msra.mxu0 %v1207
        %1224 = vmatprep.subr.bf16.mxu0 0
        %1225 = vmatpush1.bf16.msra.mxu0 %v1206
        %1226 = vmatprep.subr.bf16.mxu0 0
        %1227 = vmatpush1.bf16.msra.mxu0 %v1205
        %1228 = vmatprep.subr.bf16.mxu0 0
        %1229 = vmatpush1.bf16.msra.mxu0 %v1204
        %1230 = vmatprep.subr.bf16.mxu0 0
        %1231 = vmatpush1.bf16.msra.mxu0 %v1203
        %1232 = vmatprep.subr.bf16.mxu0 0
        %1233 = vmatpush1.bf16.msra.mxu0 %v1202
        %1234 = vmatprep.subr.bf16.mxu0 0
        %1235 = vmatpush2.bf16.msra.mxu0 0
        %1236 = vmatprep.subr.bf16.mxu0 0
        %1237 = vmatpush2.bf16.msra.mxu0 0
        %1238 = vmatprep.subr.bf16.mxu0 0
        %1239 = vmatpush2.bf16.msra.mxu0 0
        %1240 = vmatprep.subr.bf16.mxu0 0
        %1241 = vmatpush2.bf16.msra.mxu0 0
        %1242 = vmatprep.subr.bf16.mxu0 0
        %1243 = vmatpush2.bf16.msra.mxu0 0
        %1244 = vmatprep.subr.bf16.mxu0 0
        %1245 = vmatpush2.bf16.msra.mxu0 0
        %1246 = vmatprep.subr.bf16.mxu0 0
        %1247 = vmatpush2.bf16.msra.mxu0 0
        %1248 = vmatprep.subr.bf16.mxu0 0
        %1249 = vmatpush2.bf16.msra.mxu0 0
        %1250 = vmatprep.mubr.bf16.mxu0 0
        %1251 = vmatmul.mubr.bf16.gmra.mxu0 %v1166
        %v1252 = vpop.f32.mrf.mxu0
        %v1253 = vadd.f32 0.0, %v1252
        %v1254 = vpop.f32.mrf.mxu0
        %v1255 = vpop.f32.mrf.mxu0
        %v1256 = vadd.f32 0.0, %v1255
        %v1257 = vpop.f32.mrf.mxu0
        %1258 = vmatprep.mubr.bf16.mxu0 0
        %1259 = vmatmul.mubr.bf16.gmra.mxu0 %v1167
        %v1260 = vpop.f32.mrf.mxu0
        %v1261 = vadd.f32 0.0, %v1260
        %v1262 = vpop.f32.mrf.mxu0
        %v1263 = vpop.f32.mrf.mxu0
        %v1264 = vadd.f32 0.0, %v1263
        %v1265 = vpop.f32.mrf.mxu0
        %1266 = vdwg.mxu0
        %v1267 = vadd.f32 %v1130, %v1253
        %v1268 = vadd.f32 %v1131, %v1256
        %v1269 = vadd.f32 %v1132, %v1261
        %v1270 = vadd.f32 %v1133, %v1264
        %s1271 = scalar_lea.vmem %s2, 448
        %v1272 = vld [vmem:[%s1271] sm:$0xf]
        %v1273 = vld [vmem:[%s1271 + $0x4] sm:$0xf]
        %v1274 = vld [vmem:[%s1271 + $0x8] sm:$0xf]
        %v1275 = vld [vmem:[%s1271 + $0xc] sm:$0xf]
        %v1276 = vld [vmem:[%s1271 + $0x10] sm:$0xf]
        %v1277 = vld [vmem:[%s1271 + $0x14] sm:$0xf]
        %v1278 = vld [vmem:[%s1271 + $0x18] sm:$0xf]
        %v1279 = vld [vmem:[%s1271 + $0x1c] sm:$0xf]
        %v1280 = vld [vmem:[%s1271 + $0x20] sm:$0xf]
        %v1281 = vld [vmem:[%s1271 + $0x24] sm:$0xf]
        %v1282 = vld [vmem:[%s1271 + $0x28] sm:$0xf]
        %v1283 = vld [vmem:[%s1271 + $0x2c] sm:$0xf]
        %v1284 = vld [vmem:[%s1271 + $0x30] sm:$0xf]
        %v1285 = vld [vmem:[%s1271 + $0x34] sm:$0xf]
        %v1286 = vld [vmem:[%s1271 + $0x38] sm:$0xf]
        %v1287 = vld [vmem:[%s1271 + $0x3c] sm:$0xf]
        %v1289 = vunpack.c.l.b16 %v1140
        %v1290 = vpack.c.b16 %v1164, %v1163
        %v1291 = vpack.c.b16 %v1289, %v1165
        %v1310 = vunpack.c.l.b16 %v1272
        %v1311 = vunpack.c.l.b16 %v1273
        %v1312 = vunpack.c.l.b16 %v1274
        %v1313 = vunpack.c.l.b16 %v1275
        %v1314 = vunpack.c.l.b16 %v1276
        %v1315 = vunpack.c.l.b16 %v1277
        %v1316 = vunpack.c.l.b16 %v1278
        %v1317 = vunpack.c.l.b16 %v1279
        %v1318 = vunpack.c.l.b16 %v1280
        %v1319 = vunpack.c.l.b16 %v1281
        %v1320 = vunpack.c.l.b16 %v1282
        %v1321 = vunpack.c.l.b16 %v1283
        %v1322 = vunpack.c.l.b16 %v1284
        %v1323 = vunpack.c.l.b16 %v1285
        %v1324 = vunpack.c.l.b16 %v1286
        %v1325 = vunpack.c.l.b16 %v1287
        %v1326 = vpack.c.b16 %v1311, %v1310
        %v1327 = vpack.c.b16 %v1313, %v1312
        %v1328 = vpack.c.b16 %v1315, %v1314
        %v1329 = vpack.c.b16 %v1317, %v1316
        %v1330 = vpack.c.b16 %v1319, %v1318
        %v1331 = vpack.c.b16 %v1321, %v1320
        %v1332 = vpack.c.b16 %v1323, %v1322
        %v1333 = vpack.c.b16 %v1325, %v1324
        %1342 = vmatprep.subr.bf16.mxu0 0
        %1343 = vmatpush1.bf16.msra.mxu0 %v1333
        %1344 = vmatprep.subr.bf16.mxu0 0
        %1345 = vmatpush1.bf16.msra.mxu0 %v1332
        %1346 = vmatprep.subr.bf16.mxu0 0
        %1347 = vmatpush1.bf16.msra.mxu0 %v1331
        %1348 = vmatprep.subr.bf16.mxu0 0
        %1349 = vmatpush1.bf16.msra.mxu0 %v1330
        %1350 = vmatprep.subr.bf16.mxu0 0
        %1351 = vmatpush1.bf16.msra.mxu0 %v1329
        %1352 = vmatprep.subr.bf16.mxu0 0
        %1353 = vmatpush1.bf16.msra.mxu0 %v1328
        %1354 = vmatprep.subr.bf16.mxu0 0
        %1355 = vmatpush1.bf16.msra.mxu0 %v1327
        %1356 = vmatprep.subr.bf16.mxu0 0
        %1357 = vmatpush1.bf16.msra.mxu0 %v1326
        %1358 = vmatprep.subr.bf16.mxu0 0
        %1359 = vmatpush2.bf16.msra.mxu0 0
        %1360 = vmatprep.subr.bf16.mxu0 0
        %1361 = vmatpush2.bf16.msra.mxu0 0
        %1362 = vmatprep.subr.bf16.mxu0 0
        %1363 = vmatpush2.bf16.msra.mxu0 0
        %1364 = vmatprep.subr.bf16.mxu0 0
        %1365 = vmatpush2.bf16.msra.mxu0 0
        %1366 = vmatprep.subr.bf16.mxu0 0
        %1367 = vmatpush2.bf16.msra.mxu0 0
        %1368 = vmatprep.subr.bf16.mxu0 0
        %1369 = vmatpush2.bf16.msra.mxu0 0
        %1370 = vmatprep.subr.bf16.mxu0 0
        %1371 = vmatpush2.bf16.msra.mxu0 0
        %1372 = vmatprep.subr.bf16.mxu0 0
        %1373 = vmatpush2.bf16.msra.mxu0 0
        %1374 = vmatprep.mubr.bf16.mxu0 0
        %1375 = vmatmul.mubr.bf16.gmra.mxu0 %v1290
        %v1376 = vpop.f32.mrf.mxu0
        %v1377 = vadd.f32 0.0, %v1376
        %v1378 = vpop.f32.mrf.mxu0
        %v1379 = vpop.f32.mrf.mxu0
        %v1380 = vadd.f32 0.0, %v1379
        %v1381 = vpop.f32.mrf.mxu0
        %1382 = vmatprep.mubr.bf16.mxu0 0
        %1383 = vmatmul.mubr.bf16.gmra.mxu0 %v1291
        %v1384 = vpop.f32.mrf.mxu0
        %v1385 = vadd.f32 0.0, %v1384
        %v1386 = vpop.f32.mrf.mxu0
        %v1387 = vpop.f32.mrf.mxu0
        %v1388 = vadd.f32 0.0, %v1387
        %v1389 = vpop.f32.mrf.mxu0
        %1390 = vdwg.mxu0
        %v1391 = vadd.f32 %v1267, %v1377
        %v1392 = vadd.f32 %v1268, %v1380
        %v1393 = vadd.f32 %v1269, %v1385
        %v1394 = vadd.f32 %v1270, %v1388
        %s1395 = scalar_lea.vmem %s558, 48 [#allocation2]
        %v1396 = vld [vmem:[%s1395] sm:$0xf]
        %v1397 = vld [vmem:[%s1395 + $0x4] sm:$0xf]
        %v1398 = vld [vmem:[%s1395 + $0x8] sm:$0xf]
        %v1399 = vld [vmem:[%s1395 + $0xc] sm:$0xf]
        %s1400 = scalar_lea.vmem %s2, 192
        %v1401 = vld [vmem:[%s1400] sm:$0xf]
        %v1402 = vld [vmem:[%s1400 + $0x4] sm:$0xf]
        %v1403 = vld [vmem:[%s1400 + $0x8] sm:$0xf]
        %v1404 = vld [vmem:[%s1400 + $0xc] sm:$0xf]
        %v1405 = vld [vmem:[%s1400 + $0x10] sm:$0xf]
        %v1406 = vld [vmem:[%s1400 + $0x14] sm:$0xf]
        %v1407 = vld [vmem:[%s1400 + $0x18] sm:$0xf]
        %v1408 = vld [vmem:[%s1400 + $0x1c] sm:$0xf]
        %v1409 = vld [vmem:[%s1400 + $0x20] sm:$0xf]
        %v1410 = vld [vmem:[%s1400 + $0x24] sm:$0xf]
        %v1411 = vld [vmem:[%s1400 + $0x28] sm:$0xf]
        %v1412 = vld [vmem:[%s1400 + $0x2c] sm:$0xf]
        %v1413 = vld [vmem:[%s1400 + $0x30] sm:$0xf]
        %v1414 = vld [vmem:[%s1400 + $0x34] sm:$0xf]
        %v1415 = vld [vmem:[%s1400 + $0x38] sm:$0xf]
        %v1416 = vld [vmem:[%s1400 + $0x3c] sm:$0xf]
        %v1421 = vunpack.c.l.b16 %v1396
        %v1422 = vunpack.c.l.b16 %v1397
        %v1423 = vunpack.c.l.b16 %v1398
        %v1424 = vunpack.c.l.b16 %v1399
        %v1425 = vpack.c.b16 %v1422, %v1421
        %v1426 = vpack.c.b16 %v1424, %v1423
        %v1445 = vunpack.c.l.b16 %v1401
        %v1446 = vunpack.c.l.b16 %v1402
        %v1447 = vunpack.c.l.b16 %v1403
        %v1448 = vunpack.c.l.b16 %v1404
        %v1449 = vunpack.c.l.b16 %v1405
        %v1450 = vunpack.c.l.b16 %v1406
        %v1451 = vunpack.c.l.b16 %v1407
        %v1452 = vunpack.c.l.b16 %v1408
        %v1453 = vunpack.c.l.b16 %v1409
        %v1454 = vunpack.c.l.b16 %v1410
        %v1455 = vunpack.c.l.b16 %v1411
        %v1456 = vunpack.c.l.b16 %v1412
        %v1457 = vunpack.c.l.b16 %v1413
        %v1458 = vunpack.c.l.b16 %v1414
        %v1459 = vunpack.c.l.b16 %v1415
        %v1460 = vunpack.c.l.b16 %v1416
        %v1461 = vpack.c.b16 %v1446, %v1445
        %v1462 = vpack.c.b16 %v1448, %v1447
        %v1463 = vpack.c.b16 %v1450, %v1449
        %v1464 = vpack.c.b16 %v1452, %v1451
        %v1465 = vpack.c.b16 %v1454, %v1453
        %v1466 = vpack.c.b16 %v1456, %v1455
        %v1467 = vpack.c.b16 %v1458, %v1457
        %v1468 = vpack.c.b16 %v1460, %v1459
        %1477 = vmatprep.subr.bf16.mxu0 0
        %1478 = vmatpush1.bf16.msra.mxu0 %v1468
        %1479 = vmatprep.subr.bf16.mxu0 0
        %1480 = vmatpush1.bf16.msra.mxu0 %v1467
        %1481 = vmatprep.subr.bf16.mxu0 0
        %1482 = vmatpush1.bf16.msra.mxu0 %v1466
        %1483 = vmatprep.subr.bf16.mxu0 0
        %1484 = vmatpush1.bf16.msra.mxu0 %v1465
        %1485 = vmatprep.subr.bf16.mxu0 0
        %1486 = vmatpush1.bf16.msra.mxu0 %v1464
        %1487 = vmatprep.subr.bf16.mxu0 0
        %1488 = vmatpush1.bf16.msra.mxu0 %v1463
        %1489 = vmatprep.subr.bf16.mxu0 0
        %1490 = vmatpush1.bf16.msra.mxu0 %v1462
        %1491 = vmatprep.subr.bf16.mxu0 0
        %1492 = vmatpush1.bf16.msra.mxu0 %v1461
        %1493 = vmatprep.subr.bf16.mxu0 0
        %1494 = vmatpush2.bf16.msra.mxu0 0
        %1495 = vmatprep.subr.bf16.mxu0 0
        %1496 = vmatpush2.bf16.msra.mxu0 0
        %1497 = vmatprep.subr.bf16.mxu0 0
        %1498 = vmatpush2.bf16.msra.mxu0 0
        %1499 = vmatprep.subr.bf16.mxu0 0
        %1500 = vmatpush2.bf16.msra.mxu0 0
        %1501 = vmatprep.subr.bf16.mxu0 0
        %1502 = vmatpush2.bf16.msra.mxu0 0
        %1503 = vmatprep.subr.bf16.mxu0 0
        %1504 = vmatpush2.bf16.msra.mxu0 0
        %1505 = vmatprep.subr.bf16.mxu0 0
        %1506 = vmatpush2.bf16.msra.mxu0 0
        %1507 = vmatprep.subr.bf16.mxu0 0
        %1508 = vmatpush2.bf16.msra.mxu0 0
        %1509 = vmatprep.mubr.bf16.mxu0 0
        %1510 = vmatmul.mubr.bf16.gmra.mxu0 %v1425
        %v1511 = vpop.f32.mrf.mxu0
        %v1512 = vadd.f32 0.0, %v1511
        %v1513 = vpop.f32.mrf.mxu0
        %v1514 = vpop.f32.mrf.mxu0
        %v1515 = vadd.f32 0.0, %v1514
        %v1516 = vpop.f32.mrf.mxu0
        %1517 = vmatprep.mubr.bf16.mxu0 0
        %1518 = vmatmul.mubr.bf16.gmra.mxu0 %v1426
        %v1519 = vpop.f32.mrf.mxu0
        %v1520 = vadd.f32 0.0, %v1519
        %v1521 = vpop.f32.mrf.mxu0
        %v1522 = vpop.f32.mrf.mxu0
        %v1523 = vadd.f32 0.0, %v1522
        %v1524 = vpop.f32.mrf.mxu0
        %1525 = vdwg.mxu0
        %v1526 = vadd.f32 %v1391, %v1512
        %v1527 = vadd.f32 %v1392, %v1515
        %v1528 = vadd.f32 %v1393, %v1520
        %v1529 = vadd.f32 %v1394, %v1523
        %s1530 = scalar_lea.vmem %s558, 64 [#allocation2]
        %v1531 = vld [vmem:[%s1530] sm:$0xf]
        %v1532 = vld [vmem:[%s1530 + $0x4] sm:$0xf]
        %v1533 = vld [vmem:[%s1530 + $0x8] sm:$0xf]
        %v1534 = vld [vmem:[%s1530 + $0xc] sm:$0xf]
        %s1535 = scalar_lea.vmem %s2, 320
        %v1536 = vld [vmem:[%s1535] sm:$0xf]
        %v1537 = vld [vmem:[%s1535 + $0x4] sm:$0xf]
        %v1538 = vld [vmem:[%s1535 + $0x8] sm:$0xf]
        %v1539 = vld [vmem:[%s1535 + $0xc] sm:$0xf]
        %v1540 = vld [vmem:[%s1535 + $0x10] sm:$0xf]
        %v1541 = vld [vmem:[%s1535 + $0x14] sm:$0xf]
        %v1542 = vld [vmem:[%s1535 + $0x18] sm:$0xf]
        %v1543 = vld [vmem:[%s1535 + $0x1c] sm:$0xf]
        %v1544 = vld [vmem:[%s1535 + $0x20] sm:$0xf]
        %v1545 = vld [vmem:[%s1535 + $0x24] sm:$0xf]
        %v1546 = vld [vmem:[%s1535 + $0x28] sm:$0xf]
        %v1547 = vld [vmem:[%s1535 + $0x2c] sm:$0xf]
        %v1548 = vld [vmem:[%s1535 + $0x30] sm:$0xf]
        %v1549 = vld [vmem:[%s1535 + $0x34] sm:$0xf]
        %v1550 = vld [vmem:[%s1535 + $0x38] sm:$0xf]
        %v1551 = vld [vmem:[%s1535 + $0x3c] sm:$0xf]
        %v1556 = vunpack.c.l.b16 %v1531
        %v1557 = vunpack.c.l.b16 %v1532
        %v1558 = vunpack.c.l.b16 %v1533
        %v1559 = vunpack.c.l.b16 %v1534
        %v1560 = vpack.c.b16 %v1557, %v1556
        %v1561 = vpack.c.b16 %v1559, %v1558
        %v1580 = vunpack.c.l.b16 %v1536
        %v1581 = vunpack.c.l.b16 %v1537
        %v1582 = vunpack.c.l.b16 %v1538
        %v1583 = vunpack.c.l.b16 %v1539
        %v1584 = vunpack.c.l.b16 %v1540
        %v1585 = vunpack.c.l.b16 %v1541
        %v1586 = vunpack.c.l.b16 %v1542
        %v1587 = vunpack.c.l.b16 %v1543
        %v1588 = vunpack.c.l.b16 %v1544
        %v1589 = vunpack.c.l.b16 %v1545
        %v1590 = vunpack.c.l.b16 %v1546
        %v1591 = vunpack.c.l.b16 %v1547
        %v1592 = vunpack.c.l.b16 %v1548
        %v1593 = vunpack.c.l.b16 %v1549
        %v1594 = vunpack.c.l.b16 %v1550
        %v1595 = vunpack.c.l.b16 %v1551
        %v1596 = vpack.c.b16 %v1581, %v1580
        %v1597 = vpack.c.b16 %v1583, %v1582
        %v1598 = vpack.c.b16 %v1585, %v1584
        %v1599 = vpack.c.b16 %v1587, %v1586
        %v1600 = vpack.c.b16 %v1589, %v1588
        %v1601 = vpack.c.b16 %v1591, %v1590
        %v1602 = vpack.c.b16 %v1593, %v1592
        %v1603 = vpack.c.b16 %v1595, %v1594
        %1612 = vmatprep.subr.bf16.mxu0 0
        %1613 = vmatpush1.bf16.msra.mxu0 %v1603
        %1614 = vmatprep.subr.bf16.mxu0 0
        %1615 = vmatpush1.bf16.msra.mxu0 %v1602
        %1616 = vmatprep.subr.bf16.mxu0 0
        %1617 = vmatpush1.bf16.msra.mxu0 %v1601
        %1618 = vmatprep.subr.bf16.mxu0 0
        %1619 = vmatpush1.bf16.msra.mxu0 %v1600
        %1620 = vmatprep.subr.bf16.mxu0 0
        %1621 = vmatpush1.bf16.msra.mxu0 %v1599
        %1622 = vmatprep.subr.bf16.mxu0 0
        %1623 = vmatpush1.bf16.msra.mxu0 %v1598
        %1624 = vmatprep.subr.bf16.mxu0 0
        %1625 = vmatpush1.bf16.msra.mxu0 %v1597
        %1626 = vmatprep.subr.bf16.mxu0 0
        %1627 = vmatpush1.bf16.msra.mxu0 %v1596
        %1628 = vmatprep.subr.bf16.mxu0 0
        %1629 = vmatpush2.bf16.msra.mxu0 0
        %1630 = vmatprep.subr.bf16.mxu0 0
        %1631 = vmatpush2.bf16.msra.mxu0 0
        %1632 = vmatprep.subr.bf16.mxu0 0
        %1633 = vmatpush2.bf16.msra.mxu0 0
        %1634 = vmatprep.subr.bf16.mxu0 0
        %1635 = vmatpush2.bf16.msra.mxu0 0
        %1636 = vmatprep.subr.bf16.mxu0 0
        %1637 = vmatpush2.bf16.msra.mxu0 0
        %1638 = vmatprep.subr.bf16.mxu0 0
        %1639 = vmatpush2.bf16.msra.mxu0 0
        %1640 = vmatprep.subr.bf16.mxu0 0
        %1641 = vmatpush2.bf16.msra.mxu0 0
        %1642 = vmatprep.subr.bf16.mxu0 0
        %1643 = vmatpush2.bf16.msra.mxu0 0
        %1644 = vmatprep.mubr.bf16.mxu0 0
        %1645 = vmatmul.mubr.bf16.gmra.mxu0 %v1560
        %v1646 = vpop.f32.mrf.mxu0
        %v1647 = vadd.f32 0.0, %v1646
        %v1648 = vpop.f32.mrf.mxu0
        %v1649 = vpop.f32.mrf.mxu0
        %v1650 = vadd.f32 0.0, %v1649
        %v1651 = vpop.f32.mrf.mxu0
        %1652 = vmatprep.mubr.bf16.mxu0 0
        %1653 = vmatmul.mubr.bf16.gmra.mxu0 %v1561
        %v1654 = vpop.f32.mrf.mxu0
        %v1655 = vadd.f32 0.0, %v1654
        %v1656 = vpop.f32.mrf.mxu0
        %v1657 = vpop.f32.mrf.mxu0
        %v1658 = vadd.f32 0.0, %v1657
        %v1659 = vpop.f32.mrf.mxu0
        %1660 = vdwg.mxu0
        %v1661 = vadd.f32 %v1526, %v1647
        %v1662 = vadd.f32 %v1527, %v1650
        %v1663 = vadd.f32 %v1528, %v1655
        %v1664 = vadd.f32 %v1529, %v1658
        %s1665 = scalar_lea.vmem %s558, 80 [#allocation2]
        %v1666 = vld [vmem:[%s1665] sm:$0xf]
        %v1667 = vld [vmem:[%s1665 + $0x4] sm:$0xf]
        %v1668 = vld [vmem:[%s1665 + $0x8] sm:$0xf]
        %v1669 = vld [vmem:[%s1665 + $0xc] sm:$0xf]
        %s1670 = scalar_lea.vmem %s2, 256
        %v1671 = vld [vmem:[%s1670] sm:$0xf]
        %v1672 = vld [vmem:[%s1670 + $0x4] sm:$0xf]
        %v1673 = vld [vmem:[%s1670 + $0x8] sm:$0xf]
        %v1674 = vld [vmem:[%s1670 + $0xc] sm:$0xf]
        %v1675 = vld [vmem:[%s1670 + $0x10] sm:$0xf]
        %v1676 = vld [vmem:[%s1670 + $0x14] sm:$0xf]
        %v1677 = vld [vmem:[%s1670 + $0x18] sm:$0xf]
        %v1678 = vld [vmem:[%s1670 + $0x1c] sm:$0xf]
        %v1679 = vld [vmem:[%s1670 + $0x20] sm:$0xf]
        %v1680 = vld [vmem:[%s1670 + $0x24] sm:$0xf]
        %v1681 = vld [vmem:[%s1670 + $0x28] sm:$0xf]
        %v1682 = vld [vmem:[%s1670 + $0x2c] sm:$0xf]
        %v1683 = vld [vmem:[%s1670 + $0x30] sm:$0xf]
        %v1684 = vld [vmem:[%s1670 + $0x34] sm:$0xf]
        %v1685 = vld [vmem:[%s1670 + $0x38] sm:$0xf]
        %v1686 = vld [vmem:[%s1670 + $0x3c] sm:$0xf]
        %v1691 = vunpack.c.l.b16 %v1666
        %v1692 = vunpack.c.l.b16 %v1667
        %v1693 = vunpack.c.l.b16 %v1668
        %v1694 = vunpack.c.l.b16 %v1669
        %v1695 = vpack.c.b16 %v1692, %v1691
        %v1696 = vpack.c.b16 %v1694, %v1693
        %v1715 = vunpack.c.l.b16 %v1671
        %v1716 = vunpack.c.l.b16 %v1672
        %v1717 = vunpack.c.l.b16 %v1673
        %v1718 = vunpack.c.l.b16 %v1674
        %v1719 = vunpack.c.l.b16 %v1675
        %v1720 = vunpack.c.l.b16 %v1676
        %v1721 = vunpack.c.l.b16 %v1677
        %v1722 = vunpack.c.l.b16 %v1678
        %v1723 = vunpack.c.l.b16 %v1679
        %v1724 = vunpack.c.l.b16 %v1680
        %v1725 = vunpack.c.l.b16 %v1681
        %v1726 = vunpack.c.l.b16 %v1682
        %v1727 = vunpack.c.l.b16 %v1683
        %v1728 = vunpack.c.l.b16 %v1684
        %v1729 = vunpack.c.l.b16 %v1685
        %v1730 = vunpack.c.l.b16 %v1686
        %v1731 = vpack.c.b16 %v1716, %v1715
        %v1732 = vpack.c.b16 %v1718, %v1717
        %v1733 = vpack.c.b16 %v1720, %v1719
        %v1734 = vpack.c.b16 %v1722, %v1721
        %v1735 = vpack.c.b16 %v1724, %v1723
        %v1736 = vpack.c.b16 %v1726, %v1725
        %v1737 = vpack.c.b16 %v1728, %v1727
        %v1738 = vpack.c.b16 %v1730, %v1729
        %1747 = vmatprep.subr.bf16.mxu0 0
        %1748 = vmatpush1.bf16.msra.mxu0 %v1738
        %1749 = vmatprep.subr.bf16.mxu0 0
        %1750 = vmatpush1.bf16.msra.mxu0 %v1737
        %1751 = vmatprep.subr.bf16.mxu0 0
        %1752 = vmatpush1.bf16.msra.mxu0 %v1736
        %1753 = vmatprep.subr.bf16.mxu0 0
        %1754 = vmatpush1.bf16.msra.mxu0 %v1735
        %1755 = vmatprep.subr.bf16.mxu0 0
        %1756 = vmatpush1.bf16.msra.mxu0 %v1734
        %1757 = vmatprep.subr.bf16.mxu0 0
        %1758 = vmatpush1.bf16.msra.mxu0 %v1733
        %1759 = vmatprep.subr.bf16.mxu0 0
        %1760 = vmatpush1.bf16.msra.mxu0 %v1732
        %1761 = vmatprep.subr.bf16.mxu0 0
        %1762 = vmatpush1.bf16.msra.mxu0 %v1731
        %1763 = vmatprep.subr.bf16.mxu0 0
        %1764 = vmatpush2.bf16.msra.mxu0 0
        %1765 = vmatprep.subr.bf16.mxu0 0
        %1766 = vmatpush2.bf16.msra.mxu0 0
        %1767 = vmatprep.subr.bf16.mxu0 0
        %1768 = vmatpush2.bf16.msra.mxu0 0
        %1769 = vmatprep.subr.bf16.mxu0 0
        %1770 = vmatpush2.bf16.msra.mxu0 0
        %1771 = vmatprep.subr.bf16.mxu0 0
        %1772 = vmatpush2.bf16.msra.mxu0 0
        %1773 = vmatprep.subr.bf16.mxu0 0
        %1774 = vmatpush2.bf16.msra.mxu0 0
        %1775 = vmatprep.subr.bf16.mxu0 0
        %1776 = vmatpush2.bf16.msra.mxu0 0
        %1777 = vmatprep.subr.bf16.mxu0 0
        %1778 = vmatpush2.bf16.msra.mxu0 0
        %1779 = vmatprep.mubr.bf16.mxu0 0
        %1780 = vmatmul.mubr.bf16.gmra.mxu0 %v1695
        %v1781 = vpop.f32.mrf.mxu0
        %v1782 = vadd.f32 0.0, %v1781
        %v1783 = vpop.f32.mrf.mxu0
        %v1784 = vpop.f32.mrf.mxu0
        %v1785 = vadd.f32 0.0, %v1784
        %v1786 = vpop.f32.mrf.mxu0
        %1787 = vmatprep.mubr.bf16.mxu0 0
        %1788 = vmatmul.mubr.bf16.gmra.mxu0 %v1696
        %v1789 = vpop.f32.mrf.mxu0
        %v1790 = vadd.f32 0.0, %v1789
        %v1791 = vpop.f32.mrf.mxu0
        %v1792 = vpop.f32.mrf.mxu0
        %v1793 = vadd.f32 0.0, %v1792
        %v1794 = vpop.f32.mrf.mxu0
        %1795 = vdwg.mxu0
        %v1796 = vadd.f32 %v1661, %v1782
        %v1797 = vadd.f32 %v1662, %v1785
        %v1798 = vadd.f32 %v1663, %v1790
        %v1799 = vadd.f32 %v1664, %v1793
        %v1800 = vld [vmem:[%s3] sm:$0x1]
        %v1802 = vlaneseq
        %v1803 = vshrl.u32 %v1802, 7
        %v1804 = vsub.s32 0, %v1803
        %v1805 = vrot.slane %v1800, %v1804
        %v1807 = vadd.f32 %v1796, %v1805
        %v1808 = vadd.f32 %v1797, %v1805
        %v1809 = vadd.f32 %v1798, %v1805
        %v1810 = vadd.f32 %v1799, %v1805
        %v1811 = vmin.f32 %v1807, 0.0
        %v1812 = vmin.f32 %v1808, 0.0
        %v1813 = vmin.f32 %v1809, 0.0
        %v1814 = vmin.f32 %v1810, 0.0
        %v1815 = vmul.f32 %v1811, 1.442695
        %v1816 = vpow.pop %v1815
        %v1817 = vmul.f32 %v1812, 1.442695
        %v1818 = vpow.pop %v1817
        %v1819 = vmul.f32 %v1813, 1.442695
        %v1820 = vpow.pop %v1819
        %v1821 = vmul.f32 %v1814, 1.442695
        %v1822 = vpow.pop %v1821
        %v1823 = vsub.f32 %v1816, 1.0
        %v1824 = vsub.f32 %v1818, 1.0
        %v1825 = vsub.f32 %v1820, 1.0
        %v1826 = vsub.f32 %v1822, 1.0
        %v1827 = vmul.f32 %v1823, 1.6732632
        %v1828 = vmul.f32 %v1824, 1.6732632
        %v1829 = vmul.f32 %v1825, 1.6732632
        %v1830 = vmul.f32 %v1826, 1.6732632
        %vm1831 = vcmp.gt.f32.partialorder %v1807, 0.0
        %vm1832 = vcmp.gt.f32.partialorder %v1808, 0.0
        %vm1833 = vcmp.gt.f32.partialorder %v1809, 0.0
        %vm1834 = vcmp.gt.f32.partialorder %v1810, 0.0
        %v1835 = vsel %vm1831, %v1807, %v1827
        %v1836 = vsel %vm1832, %v1808, %v1828
        %v1837 = vsel %vm1833, %v1809, %v1829
        %v1838 = vsel %vm1834, %v1810, %v1830
        %v1839 = vmul.f32 %v1835, 1.050701
        %v1840 = vmul.f32 %v1836, 1.050701
        %v1841 = vmul.f32 %v1837, 1.050701
        %v1842 = vmul.f32 %v1838, 1.050701
        %v1843 = vlaneseq
        %v1844 = vshrl.u32 %v1843, 7
        %vm1845 = vcmp.lt.s32.totalorder %v1844, 4
        %v1846 = vsel %vm1845, %v1839, -inf
        %v1847 = vsel %vm1845, %v1840, -inf
        %v1848 = vsel %vm1845, %v1841, -inf
        %v1849 = vsel %vm1845, %v1842, -inf
        %1850 = vst [vmem:[%s620] sm:$0xff] %v1846
        %1851 = vst [vmem:[%s620 + $0x8] sm:$0xff] %v1847
        %1852 = vst [vmem:[%s620 + $0x10] sm:$0xff] %v1848
        %1853 = vst [vmem:[%s620 + $0x18] sm:$0xff] %v1849
        %v1854 = vrot.slane %v1846, 4
        %v1855 = vmax.f32 %v1846, %v1854
        %v1856 = vrot.slane %v1855, 2
        %v1857 = vmax.f32 %v1855, %v1856
        %v1858 = vrot.slane %v1857, 1
        %v1859 = vmax.f32 %v1857, %v1858
        %v1860 = vrot.slane %v1847, 4
        %v1861 = vmax.f32 %v1847, %v1860
        %v1862 = vrot.slane %v1861, 2
        %v1863 = vmax.f32 %v1861, %v1862
        %v1864 = vrot.slane %v1863, 1
        %v1865 = vmax.f32 %v1863, %v1864
        %v1866 = vrot.slane %v1848, 4
        %v1867 = vmax.f32 %v1848, %v1866
        %v1868 = vrot.slane %v1867, 2
        %v1869 = vmax.f32 %v1867, %v1868
        %v1870 = vrot.slane %v1869, 1
        %v1871 = vmax.f32 %v1869, %v1870
        %v1872 = vrot.slane %v1849, 4
        %v1873 = vmax.f32 %v1849, %v1872
        %v1874 = vrot.slane %v1873, 2
        %v1875 = vmax.f32 %v1873, %v1874
        %v1876 = vrot.slane %v1875, 1
        %v1877 = vmax.f32 %v1875, %v1876
        %v1878 = vmax.f32 %v1859, %v1865
        %v1879 = vmax.f32 %v1871, %v1877
        %v1880 = vmax.f32 %v1878, %v1879
        %1881 = vst [vmem:[%s601] sm:$0x1] %v1880
        %s1882 = smul.u32 4, %s25
        %p1883 = scmp.lt.s32.totalorder %s24, 1
        %s1884 = scalar_select %p1883, %s24, 1
        %p1885 = scmp.lt.s32.totalorder %s1882, 3
        %s1886 = scalar_select %p1885, %s1882, 3
        %s1887 = smul.addr %s1884, 4
        %s1888 = sadd.s32 %s1886, %s1887
        %s1889 = smul.addr %s1888, 8
        %s1890 = scalar_lea.vmem %s4, %s1889
        %s1891 = sand.u32 %s174, 1
        %s1892 = scalar_lea.sflag [#allocation5], %s1891
        %s1893 = sand.u32 %s174, 1
        %s1894 = scalar_lea.vmem [#allocation4], %s1893
        // Predicated region
        $region140: #{aorta_forward.3} parent=130 // pred_check
          %p1895 = pneg %p156
        $region141: #{aorta_forward.3} parent=130 // pred_check_branch
          %1897 = sbr.rel (%p1895) target = $region143
        $region142: #{aorta_forward.3} parent=130 // pred_region
          %s1898 = smul.u32 4, %s25
        $region143: #{aorta_forward.3} parent=130 // pred_fallthru
          _
        // Predicated region
        $region144: #{aorta_forward.3} parent=130 // pred_check
          %p1899 = pneg %p184
        $region145: #{aorta_forward.3} parent=130 // pred_check_branch
          %1901 = sbr.rel (%p1899) target = $region147
        $region146: #{aorta_forward.3} parent=130 // pred_region
          %s1903 = ssub.s32 16, 16
          %1904 = vsyncadd %s1892, %s1903
          %s1905 = sadd.s32 %s25, %s24
          %s1906 = smul.addr %s1905, 16
          %s1907 = scalar_lea.hbm %s5, %s1906
          %s1909 = sshll.u32 %s1894, 4
          %s1910 = int_to_ptr.vmem [resolvable:$true] %s1909
          %1912 = dma.vmem_to_hbm [thread:$0]  %s1910, 16, %s1907, %s1892
        $region147: #{aorta_forward.3} parent=130 // pred_fallthru
          _
      $region131: #{aorta_forward.3} parent=5 // pred_fallthru
        _
      %p1913 = scmp.le.s32.totalorder 2, %s15
      // Predicated region
      $region148: #{aorta_forward.3} parent=5 // pred_check
        %p1914 = pneg %p1913
      $region149: #{aorta_forward.3} parent=5 // pred_check_branch
        %1916 = sbr.rel (%p1914) target = $region151
      $region150: #{aorta_forward.3} parent=5 // pred_region
        %s1917 = ssub.s32 %s15, 2
        // Predicated region
        $region152: #{aorta_forward.3} parent=150 // pred_check
          %p1918 = pneg %p162
        $region153: #{aorta_forward.3} parent=150 // pred_check_branch
          %1920 = sbr.rel (%p1918) target = $region155
        $region154: #{aorta_forward.3} parent=150 // pred_region
          %s1921 = smul.u32 4, %s27
          %p1922 = scmp.lt.s32.totalorder %s26, 1
          %s1923 = scalar_select %p1922, %s26, 1
          %p1924 = scmp.lt.s32.totalorder %s1921, 3
          %s1925 = scalar_select %p1924, %s1921, 3
          %s1926 = smul.addr %s1923, 4
          %s1927 = sadd.s32 %s1925, %s1926
          %s1928 = smul.addr %s1927, 8
          %s1929 = scalar_lea.vmem %s4, %s1928
        $region155: #{aorta_forward.3} parent=150 // pred_fallthru
          _
        // Predicated region
        $region156: #{aorta_forward.3} parent=150 // pred_check
          %p1930 = pneg %p190
        $region157: #{aorta_forward.3} parent=150 // pred_check_branch
          %1932 = sbr.rel (%p1930) target = $region159
        $region158: #{aorta_forward.3} parent=150 // pred_region
          %s1933 = sand.u32 %s175, 1
          %s1934 = scalar_lea.sflag [#allocation5], %s1933
          %s1935 = sand.u32 %s175, 1
          %s1936 = scalar_lea.vmem [#allocation4], %s1935
          %1937 = dma.done %s1934, 16
        $region159: #{aorta_forward.3} parent=150 // pred_fallthru
          _
      $region151: #{aorta_forward.3} parent=5 // pred_fallthru
        _
    $region6: #{aorta_forward.3} parent=1 // loop_footer
      %s19 = sadd.s32 1, %s15
    $region7: #{aorta_forward.3} parent=1 // loop_footer_branch
      %14 = sbr.rel target = $region3
    $region8: #{aorta_forward.3} parent=1 // loop_exit
      _
    %1938 = vsyncpa [#allocation5], 1
    %s1939 = scalar_lea.sflag [#allocation5], 1
    %1940 = vsyncpa %s1939, 1

</llo_original>
